<compile_context>
chip_gen: v6e
topology: v6e:2x2x1
jax: 0.10.0
libtpu: 0.0.40
codegen_flags: <defaults>
</compile_context>

<pallas_src>
import jax
import jax.numpy as jnp
from jax.experimental import pallas as pl
from jax.experimental.pallas import tpu as pltpu

_LANE = 128
_SUBLANE = 8
_VMEM_BUDGET = 32 * 1024 * 1024       # conservative working-set budget (v7x: 64 MiB/TC)
_VMEM_LIMIT_CAP = 48 * 1024 * 1024    # leave headroom for compiler scratch on v7x


def _round_up(n, m):
    return ((n + m - 1) // m) * m


def _pad_to_multiple(a, axis, multiple):
    size = a.shape[axis]
    pad = (-size) % multiple
    if pad == 0:
        return a
    widths = [(0, 0)] * a.ndim
    widths[axis] = (0, pad)
    return jnp.pad(a, widths)


def _attn_net_kernel(x_ref, w1_ref, b1_ref, w2_ref, b2_ref, a_ref):
    # In-kernel cast of the streamed x tile to the compute dtype (VPU work that hides
    # under the x DMA); bf16 MXU operands with fp32 accumulation; fp32 bias + tanh.
    x = x_ref[...].astype(w1_ref.dtype)
    h = jnp.tanh(
        jnp.dot(x, w1_ref[...], preferred_element_type=jnp.float32)
        + b1_ref[...]
    )
    a = (
        jnp.dot(h.astype(w2_ref.dtype), w2_ref[...],
                preferred_element_type=jnp.float32)
        + b2_ref[...]
    )
    # Store only the real n_classes columns (narrow output; store volume is negligible
    # compared to the x stream, so masked narrow stores are irrelevant here).
    a_ref[...] = a[:, : a_ref.shape[1]].astype(a_ref.dtype)


def prepare_attn_net_params(w1, b1, w2, b2, *, compute_dtype=jnp.bfloat16):
    """Pad + cast the grid-invariant weights once, outside the per-call hot path.

    w1 : (L, D) float32   (transposed vs. torch.nn.Linear.weight)
    b1 : (D,) or (1, D)
    w2 : (D, C) float32
    b2 : (C,) or (1, C)
    Set compute_dtype=jnp.float32 for a full-precision (slower) fallback.
    """
    w1 = jnp.asarray(w1)
    w2 = jnp.asarray(w2)
    b1 = jnp.asarray(b1).reshape(1, -1)
    b2 = jnp.asarray(b2).reshape(1, -1)
    L, D = w1.shape
    C = w2.shape[1]

    # Zero padding is exact: padded rows/cols contribute 0 to the valid outputs.
    w1_p = _pad_to_multiple(_pad_to_multiple(w1, 0, _LANE), 1, _LANE)
    b1_p = _pad_to_multiple(b1, 1, _LANE)
    w2_p = _pad_to_multiple(_pad_to_multiple(w2, 0, _LANE), 1, _LANE)
    b2_p = _pad_to_multiple(b2, 1, _LANE)

    return {
        "w1": w1_p.astype(compute_dtype),
        "b1": b1_p.astype(jnp.float32),
        "w2": w2_p.astype(compute_dtype),
        "b2": b2_p.astype(jnp.float32),
        "L": L, "D": D, "C": C,
    }


def attn_net_forward(x, params, *, tile_n_max=1024):
    """Pallas implementation of Attn_Net.forward. Returns (A, x) with A: (N, C)."""
    N, L = x.shape
    assert L == params["L"], (L, params["L"])
    w1_c, b1_c, w2_c, b2_c = params["w1"], params["b1"], params["w2"], params["b2"]
    L_p, D_p = w1_c.shape
    C_p = w2_c.shape[1]
    C = params["C"]

    x_item = jnp.dtype(x.dtype).itemsize
    w_item = jnp.dtype(w1_c.dtype).itemsize

    # x is fed in its native dtype (no wrapper-side cast pass); only lane-pad L.
    x_p = _pad_to_multiple(x, 1, _LANE)

    def _vmem_needed(tn):
        return (2 * tn * L_p * x_item                        # double-buffered x tiles
                + 2 * tn * C * 4                             # double-buffered out tiles
                + 2 * (L_p * D_p + D_p * C_p) * w_item       # weight buffers
                + 2 * (D_p + C_p) * 4                        # bias buffers
                + tn * L_p * w_item + tn * (D_p + C_p) * 4)  # in-kernel temporaries

    # ---- balanced row tiles: bounded padding waste, >=2 steps for v7x megacore. ----
    n8 = _round_up(max(N, 1), _SUBLANE)
    num_tiles = pl.cdiv(n8, max(_SUBLANE, int(tile_n_max)))
    if n8 >= 2 * _SUBLANE:
        num_tiles = max(num_tiles, 2)        # keep both v7x TensorCores busy
    tile_n = _round_up(pl.cdiv(n8, num_tiles), _SUBLANE)
    while tile_n > _SUBLANE and _vmem_needed(tile_n) > _VMEM_BUDGET:
        tile_n = max(_SUBLANE, _round_up(tile_n // 2, _SUBLANE))

    x_p = _pad_to_multiple(x_p, 0, tile_n)
    N_p = x_p.shape[0]
    grid = (N_p // tile_n,)

    cost = pl.CostEstimate(
        flops=2 * N_p * (L_p * D_p + D_p * C_p),
        transcendentals=N_p * D_p,
        bytes_accessed=int(N_p * L_p * x_item
                           + (w1_c.size + w2_c.size) * w_item
                           + (b1_c.size + b2_c.size) * 4
                           + N * C * 4),
    )
    vmem_limit = int(min(max(2 * _vmem_needed(tile_n), 16 * 1024 * 1024),
                         _VMEM_LIMIT_CAP))

    a_full = pl.pallas_call(
        _attn_net_kernel,
        out_shape=jax.ShapeDtypeStruct((N_p, C), jnp.float32),
        grid_spec=pltpu.PrefetchScalarGridSpec(
            num_scalar_prefetch=0,
            grid=grid,
            in_specs=[
                pl.BlockSpec((tile_n, L_p), lambda i: (i, 0)),   # streamed x row tile
                pl.BlockSpec((L_p, D_p), lambda i: (0, 0)),      # w1 (grid-invariant)
                pl.BlockSpec((1, D_p), lambda i: (0, 0)),        # b1
                pl.BlockSpec((D_p, C_p), lambda i: (0, 0)),      # w2 (lane-padded)
                pl.BlockSpec((1, C_p), lambda i: (0, 0)),        # b2
            ],
            # Narrow output: last block dim equals the full array dim, so it is legal.
            out_specs=pl.BlockSpec((tile_n, C), lambda i: (i, 0)),
        ),
        compiler_params=pltpu.CompilerParams(
            dimension_semantics=("parallel",),
            vmem_limit_bytes=vmem_limit,
        ),
        cost_estimate=cost,
    )(x_p, w1_c, b1_c, w2_c, b2_c)

    # Drop padded rows (their logits are garbage: tanh(b1) @ w2 + b2).
    a = a_full[:N] if N_p != N else a_full
    # TODO(synk): optional nn.Dropout(0.25) training-mode path not implemented
    # (module default dropout=False; eval is a no-op).
    return a, x


if __name__ == "__main__":
    # Module-default feature sizes (L=1024, D=256, n_classes=1) with a small, ragged
    # bag of N=200 instances (exercises balanced tiling, >=2 grid steps, row padding).
    N, L, D, C = 200, 1024, 256, 1

    key = jax.random.PRNGKey(0)
    k_x, k_w1, k_b1, k_w2, k_b2 = jax.random.split(key, 5)

    x = jax.random.normal(k_x, (N, L), dtype=jnp.float32)
    w1 = jax.random.normal(k_w1, (L, D), dtype=jnp.float32) * 0.05
    b1 = jax.random.normal(k_b1, (1, D), dtype=jnp.float32) * 0.05
    w2 = jax.random.normal(k_w2, (D, C), dtype=jnp.float32) * 0.05
    b2 = jax.random.normal(k_b2, (1, C), dtype=jnp.float32) * 0.05

    params = prepare_attn_net_params(w1, b1, w2, b2)   # pad + cast weights once
    a, x_out = attn_net_forward(x, params)
    jax.block_until_ready(a)
    jax.block_until_ready(x_out)

    # Reference 1: same bf16-rounded operands as the kernel (tight tolerance).
    xb = x.astype(jnp.bfloat16).astype(jnp.float32)
    w1b = w1.astype(jnp.bfloat16).astype(jnp.float32)
    w2b = w2.astype(jnp.bfloat16).astype(jnp.float32)
    h_ref = jnp.tanh(xb @ w1b + b1)
    a_ref_bf16 = h_ref.astype(jnp.bfloat16).astype(jnp.float32) @ w2b + b2
    # Reference 2: pure fp32 (torch Attn_Net semantics; loose bound on bf16 drift).
    a_ref_f32 = jnp.tanh(x @ w1 + b1) @ w2 + b2

    assert a.shape == (N, C)
    assert x_out.shape == (N, L)
    assert jnp.allclose(a, a_ref_bf16, atol=2e-2, rtol=2e-2), (
        float(jnp.max(jnp.abs(a - a_ref_bf16))))
    assert jnp.allclose(a, a_ref_f32, atol=1e-1, rtol=1e-1), (
        float(jnp.max(jnp.abs(a - a_ref_f32))))

    print("KERNEL_OK")
</pallas_src>

<mosaic_0001>
module attributes {stable_mosaic.version = 11 : i64} {
  func.func @_attn_net_kernel(%arg0: i32, %arg1: memref<104x1024xf32, #tpu.memory_space<vmem>>, %arg2: memref<1024x256xbf16, #tpu.memory_space<vmem>>, %arg3: memref<1x256xf32, #tpu.memory_space<vmem>>, %arg4: memref<256x128xbf16, #tpu.memory_space<vmem>>, %arg5: memref<1x128xf32, #tpu.memory_space<vmem>>, %arg6: memref<104x1xf32, #tpu.memory_space<vmem>>) attributes {dimension_semantics = [#tpu.dimension_semantics<parallel>], iteration_bounds = array<i64: 2>, scalar_prefetch = 0 : i64, scratch_operands = 0 : i64, tpu.core_type = #tpu.core_type<tc>, window_params = [{transform_indices = @transform_0, window_bounds = array<i64: 104, 1024>}, {pipeline_mode = #tpu.pipeline_mode<synchronous>, transform_indices = @transform_1, window_bounds = array<i64: 1024, 256>}, {pipeline_mode = #tpu.pipeline_mode<synchronous>, transform_indices = @transform_2, window_bounds = array<i64: 1, 256>}, {pipeline_mode = #tpu.pipeline_mode<synchronous>, transform_indices = @transform_3, window_bounds = array<i64: 256, 128>}, {pipeline_mode = #tpu.pipeline_mode<synchronous>, transform_indices = @transform_4, window_bounds = array<i64: 1, 128>}, {transform_indices = @transform_5, window_bounds = array<i64: 104, 1>}]} {
    %c0 = arith.constant 0 : index
    %c0_0 = arith.constant 0 : index
    %0 = vector.load %arg1[%c0, %c0_0] : memref<104x1024xf32, #tpu.memory_space<vmem>>, vector<104x1024xf32>
    %1 = arith.truncf %0 : vector<104x1024xf32> to vector<104x1024xbf16>
    %c0_1 = arith.constant 0 : index
    %c0_2 = arith.constant 0 : index
    %2 = vector.load %arg2[%c0_1, %c0_2] : memref<1024x256xbf16, #tpu.memory_space<vmem>>, vector<1024x256xbf16>
    %cst = arith.constant dense<0.000000e+00> : vector<104x256xf32>
    %3 = tpu.matmul %1, %2, %cst {dimension_numbers = #tpu.dot_dimension_numbers<[1], [0], [0], [1], [0, 0, 1, 1], [], []>} : vector<104x1024xbf16>, vector<1024x256xbf16>, vector<104x256xf32> -> vector<104x256xf32>
    %c0_3 = arith.constant 0 : index
    %c0_4 = arith.constant 0 : index
    %4 = vector.load %arg3[%c0_3, %c0_4] : memref<1x256xf32, #tpu.memory_space<vmem>>, vector<1x256xf32>
    %5 = vector.broadcast %4 : vector<1x256xf32> to vector<104x256xf32>
    %6 = arith.addf %3, %5 : vector<104x256xf32>
    %7 = math.tanh %6 : vector<104x256xf32>
    %8 = arith.truncf %7 : vector<104x256xf32> to vector<104x256xbf16>
    %c0_5 = arith.constant 0 : index
    %c0_6 = arith.constant 0 : index
    %9 = vector.load %arg4[%c0_5, %c0_6] : memref<256x128xbf16, #tpu.memory_space<vmem>>, vector<256x128xbf16>
    %cst_7 = arith.constant dense<0.000000e+00> : vector<104x128xf32>
    %10 = tpu.matmul %8, %9, %cst_7 {dimension_numbers = #tpu.dot_dimension_numbers<[1], [0], [0], [1], [0, 0, 1, 1], [], []>} : vector<104x256xbf16>, vector<256x128xbf16>, vector<104x128xf32> -> vector<104x128xf32>
    %c0_8 = arith.constant 0 : index
    %c0_9 = arith.constant 0 : index
    %11 = vector.load %arg5[%c0_8, %c0_9] : memref<1x128xf32, #tpu.memory_space<vmem>>, vector<1x128xf32>
    %12 = vector.broadcast %11 : vector<1x128xf32> to vector<104x128xf32>
    %13 = arith.addf %10, %12 : vector<104x128xf32>
    %14 = vector.extract_strided_slice %13 {offsets = [0, 0], sizes = [104, 1], strides = [1, 1]} : vector<104x128xf32> to vector<104x1xf32>
    %c0_10 = arith.constant 0 : index
    %c0_11 = arith.constant 0 : index
    %15 = vector.load %arg6[%c0_10, %c0_11] : memref<104x1xf32, #tpu.memory_space<vmem>>, vector<104x1xf32>
    tpu.vector_store %arg6[%c0_10, %c0_11], %14 {strides = array<i32>} : memref<104x1xf32, #tpu.memory_space<vmem>>, vector<104x1xf32>,
    return
  }
  func.func @transform_0(%arg0: i32) -> (i32, i32) {
    %c0_i32 = arith.constant 0 : i32
    %c0_i32_0 = arith.constant 0 : i32
    return %arg0, %c0_i32 : i32, i32
  }
  func.func @transform_1(%arg0: i32) -> (i32, i32) {
    %c0_i32 = arith.constant 0 : i32
    %c0_i32_0 = arith.constant 0 : i32
    %c0_i32_1 = arith.constant 0 : i32
    return %c0_i32, %c0_i32_0 : i32, i32
  }
  func.func @transform_2(%arg0: i32) -> (i32, i32) {
    %c0_i32 = arith.constant 0 : i32
    %c0_i32_0 = arith.constant 0 : i32
    %c0_i32_1 = arith.constant 0 : i32
    return %c0_i32, %c0_i32_0 : i32, i32
  }
  func.func @transform_3(%arg0: i32) -> (i32, i32) {
    %c0_i32 = arith.constant 0 : i32
    %c0_i32_0 = arith.constant 0 : i32
    %c0_i32_1 = arith.constant 0 : i32
    return %c0_i32, %c0_i32_0 : i32, i32
  }
  func.func @transform_4(%arg0: i32) -> (i32, i32) {
    %c0_i32 = arith.constant 0 : i32
    %c0_i32_0 = arith.constant 0 : i32
    %c0_i32_1 = arith.constant 0 : i32
    return %c0_i32, %c0_i32_0 : i32, i32
  }
  func.func @transform_5(%arg0: i32) -> (i32, i32) {
    %c0_i32 = arith.constant 0 : i32
    %c0_i32_0 = arith.constant 0 : i32
    return %arg0, %c0_i32 : i32, i32
  }
}

</mosaic_0001>

<llo_original>
// kernel: tpu_custom_call.1
$region0: #{tpu_custom_call.1}
  #allocation0 [shape = 'u32[]', space=smem, size = 0x4, offset = 0x4, fixed_abs, tag = 'smem constant byte address 0x4 - core index']
  #allocation1 [shape = 'u32[144,128]{1,0:T(1,128)}', space=vmem, size = 0x12000, scoped, tag = 'internal scratch']
  %s0 = inlined_call_operand.hbm [shape: f32[208,1024], index: 0, kind: input, shape index: {}]
  %s1 = inlined_call_operand.hbm [shape: bf16[1024,256], index: 1, kind: input, shape index: {}]
  %s2 = inlined_call_operand.vmem [shape: f32[1,256], index: 2, kind: input, shape index: {}]
  %s3 = inlined_call_operand.hbm [shape: bf16[256,128], index: 3, kind: input, shape index: {}]
  %s4 = inlined_call_operand.vmem [shape: f32[1,128], index: 4, kind: input, shape index: {}]
  %s5 = inlined_call_operand.vmem [shape: f32[208,1], index: 5, kind: output, shape index: {}]
  %s6 = sld [smem:[#allocation0]]
  $region65: #{tpu_custom_call.1} parent=0
    _
  %s8 = ssub.s32 1, %s6
  %s9 = scalar_select 0, %s8, %s6
  $region1: #{tpu_custom_call.1} parent=0
    #allocation2 [shape = 'u8[851968]{0}', space=vmem, size = 0xd0000, scoped, tag = 'input window, operand 0']
    #allocation3 [shape = 's32[2]{0}', space=sflag, size = 0x8, scoped, tag = 'scoped memory for tpu_custom_call.1']
    #allocation4 [shape = 'u8[524288]{0}', space=vmem, size = 0x80000, scoped, tag = 'input window, operand 1, single buffered']
    #allocation5 [shape = 's32[1]{0}', space=sflag, size = 0x4, scoped, tag = 'scoped memory for tpu_custom_call.1']
    #allocation6 [shape = 'u8[65536]{0}', space=vmem, size = 0x10000, scoped, tag = 'input window, operand 3, single buffered']
    %10 = vsyncpa [#allocation3], 0
    %s11 = scalar_lea.sflag [#allocation3], 1
    %12 = vsyncpa %s11, 0
    %13 = vsyncpa [#allocation5], 0
    loop: start=0, step=1, limit=4
    $region2: #{tpu_custom_call.1} parent=1 // loop_pre_header
      _
    $region3: #{tpu_custom_call.1} parent=1 // loop_header
      %s15 = sphi 0, %s19
      %p16 = scmp.ge.s32.totalorder %s15, 4
      %s25 = sphi 0, %s27
      %s28 = sphi 0, %s25
      %s29 = sphi 0, %s28
      %s45 = sphi 0, %s29
      %s49 = sphi 0, %s49
      %s51 = sphi 0, %s49
      %s52 = sphi 0, %s51
      %s66 = sphi 0, %s52
      %s70 = sphi 0, %s70
      %s72 = sphi 0, %s70
      %s73 = sphi 0, %s72
      %s87 = sphi 0, %s73
      %s91 = sphi 0, %s91
      %s93 = sphi 0, %s91
      %s94 = sphi 0, %s93
      %s108 = sphi 0, %s94
      %s112 = sphi 0, %s112
      %s114 = sphi 0, %s112
      %s115 = sphi 0, %s114
      %s129 = sphi 0, %s115
      %s135 = sphi 0, %s137
      %s138 = sphi 0, %s135
      %s139 = sphi 0, %s138
      %s155 = sphi 0, %s139
    $region4: #{tpu_custom_call.1} parent=1 // loop_header_branch
      %18 = sbr.rel (%p16) target = $region8
    $region5: #{tpu_custom_call.1} parent=1 // loop_body
      %s20 = ssub.s32 %s15, 1
      %s21 = ssub.s32 %s15, 2
      %s22 = sadd.s32 %s15, 1
      %s23 = ssub.s32 %s15, %s22
      %p24 = scmp.eq.s32.totalorder %s23, 0
      %s26 = sadd.s32 %s25, 1
      %s27 = scalar_select %p24, %s25, %s26
      %p30 = pneg %p24
      %p31 = scmp.eq.s32.totalorder %s15, 1
      %p32 = por %p30, %p31
      %p33 = scmp.ne.s32.totalorder %s25, %s28
      %p34 = scmp.eq.s32.totalorder %s15, 0
      %p35 = por %p33, %p34
      %p36 = scmp.ne.s32.totalorder %s25, %s28
      %p37 = scmp.eq.s32.totalorder %s20, 1
      %p38 = por %p36, %p37
      %p39 = scmp.ne.s32.totalorder %s28, %s29
      %p40 = scmp.eq.s32.totalorder %s20, 0
      %p41 = por %p39, %p40
      %p42 = scmp.ne.s32.totalorder %s28, %s29
      %p43 = scmp.eq.s32.totalorder %s21, 1
      %p44 = por %p42, %p43
      %p46 = scmp.ne.s32.totalorder %s29, %s45
      %p47 = scmp.eq.s32.totalorder %s21, 0
      %p48 = por %p46, %p47
      %s50 = sadd.s32 %s49, 1
      %p53 = scmp.eq.s32.totalorder %s15, 1
      %p54 = scmp.ne.s32.totalorder %s49, %s51
      %p55 = scmp.eq.s32.totalorder %s15, 0
      %p56 = por %p54, %p55
      %p57 = scmp.ne.s32.totalorder %s49, %s51
      %p58 = scmp.eq.s32.totalorder %s20, 1
      %p59 = por %p57, %p58
      %p60 = scmp.ne.s32.totalorder %s51, %s52
      %p61 = scmp.eq.s32.totalorder %s20, 0
      %p62 = por %p60, %p61
      %p63 = scmp.ne.s32.totalorder %s51, %s52
      %p64 = scmp.eq.s32.totalorder %s21, 1
      %p65 = por %p63, %p64
      %p67 = scmp.ne.s32.totalorder %s52, %s66
      %p68 = scmp.eq.s32.totalorder %s21, 0
      %p69 = por %p67, %p68
      %s71 = sadd.s32 %s70, 1
      %p74 = scmp.eq.s32.totalorder %s15, 1
      %p75 = scmp.ne.s32.totalorder %s70, %s72
      %p76 = scmp.eq.s32.totalorder %s15, 0
      %p77 = por %p75, %p76
      %p78 = scmp.ne.s32.totalorder %s70, %s72
      %p79 = scmp.eq.s32.totalorder %s20, 1
      %p80 = por %p78, %p79
      %p81 = scmp.ne.s32.totalorder %s72, %s73
      %p82 = scmp.eq.s32.totalorder %s20, 0
      %p83 = por %p81, %p82
      %p84 = scmp.ne.s32.totalorder %s72, %s73
      %p85 = scmp.eq.s32.totalorder %s21, 1
      %p86 = por %p84, %p85
      %p88 = scmp.ne.s32.totalorder %s73, %s87
      %p89 = scmp.eq.s32.totalorder %s21, 0
      %p90 = por %p88, %p89
      %s92 = sadd.s32 %s91, 1
      %p95 = scmp.eq.s32.totalorder %s15, 1
      %p96 = scmp.ne.s32.totalorder %s91, %s93
      %p97 = scmp.eq.s32.totalorder %s15, 0
      %p98 = por %p96, %p97
      %p99 = scmp.ne.s32.totalorder %s91, %s93
      %p100 = scmp.eq.s32.totalorder %s20, 1
      %p101 = por %p99, %p100
      %p102 = scmp.ne.s32.totalorder %s93, %s94
      %p103 = scmp.eq.s32.totalorder %s20, 0
      %p104 = por %p102, %p103
      %p105 = scmp.ne.s32.totalorder %s93, %s94
      %p106 = scmp.eq.s32.totalorder %s21, 1
      %p107 = por %p105, %p106
      %p109 = scmp.ne.s32.totalorder %s94, %s108
      %p110 = scmp.eq.s32.totalorder %s21, 0
      %p111 = por %p109, %p110
      %s113 = sadd.s32 %s112, 1
      %p116 = scmp.eq.s32.totalorder %s15, 1
      %p117 = scmp.ne.s32.totalorder %s112, %s114
      %p118 = scmp.eq.s32.totalorder %s15, 0
      %p119 = por %p117, %p118
      %p120 = scmp.ne.s32.totalorder %s112, %s114
      %p121 = scmp.eq.s32.totalorder %s20, 1
      %p122 = por %p120, %p121
      %p123 = scmp.ne.s32.totalorder %s114, %s115
      %p124 = scmp.eq.s32.totalorder %s20, 0
      %p125 = por %p123, %p124
      %p126 = scmp.ne.s32.totalorder %s114, %s115
      %p127 = scmp.eq.s32.totalorder %s21, 1
      %p128 = por %p126, %p127
      %p130 = scmp.ne.s32.totalorder %s115, %s129
      %p131 = scmp.eq.s32.totalorder %s21, 0
      %p132 = por %p130, %p131
      %s133 = ssub.s32 %s15, %s22
      %p134 = scmp.eq.s32.totalorder %s133, 0
      %s136 = sadd.s32 %s135, 1
      %s137 = scalar_select %p134, %s135, %s136
      %p140 = pneg %p134
      %p141 = scmp.eq.s32.totalorder %s15, 1
      %p142 = por %p140, %p141
      %p143 = scmp.ne.s32.totalorder %s135, %s138
      %p144 = scmp.eq.s32.totalorder %s15, 0
      %p145 = por %p143, %p144
      %p146 = scmp.ne.s32.totalorder %s135, %s138
      %p147 = scmp.eq.s32.totalorder %s20, 1
      %p148 = por %p146, %p147
      %p149 = scmp.ne.s32.totalorder %s138, %s139
      %p150 = scmp.eq.s32.totalorder %s20, 0
      %p151 = por %p149, %p150
      %p152 = scmp.ne.s32.totalorder %s138, %s139
      %p153 = scmp.eq.s32.totalorder %s21, 1
      %p154 = por %p152, %p153
      %p156 = scmp.ne.s32.totalorder %s139, %s155
      %p157 = scmp.eq.s32.totalorder %s21, 0
      %p158 = por %p156, %p157
      %p159 = scmp.le.s32.totalorder 1, %s15
      %p160 = scmp.lt.s32.totalorder %s15, 3
      %p161 = pnand %p159, %p160
      %p162 = pneg %p161
      // Predicated region
      $region9: #{tpu_custom_call.1} parent=5 // pred_check
        _
      $region10: #{tpu_custom_call.1} parent=5 // pred_check_branch
        %164 = sbr.rel (%p161) target = $region12
      $region11: #{tpu_custom_call.1} parent=5 // pred_region
        %s165 = ssub.s32 %s15, 1
        // Predicated region
        $region13: #{tpu_custom_call.1} parent=11 // pred_check
          %p166 = pneg %p62
        $region14: #{tpu_custom_call.1} parent=11 // pred_check_branch
          %168 = sbr.rel (%p166) target = $region16
        $region15: #{tpu_custom_call.1} parent=11 // pred_region
          %s170 = ssub.s32 16384, 16384
          %171 = vsyncadd [#allocation5], %s170
          %s172 = sshll.u32 [#allocation4], 4
          %s173 = int_to_ptr.vmem [resolvable:$true] %s172
          %178 = dma.hbm_to_vmem [thread:$0]  %s1, 16384, %s173, [#allocation5], 128, 128, 8
        $region16: #{tpu_custom_call.1} parent=11 // pred_fallthru
          _
        // Predicated region
        $region17: #{tpu_custom_call.1} parent=11 // pred_check
          %p179 = pneg %p83
        $region18: #{tpu_custom_call.1} parent=11 // pred_check_branch
          %181 = sbr.rel (%p179) target = $region20
        $region19: #{tpu_custom_call.1} parent=11 // pred_region
          _
        $region20: #{tpu_custom_call.1} parent=11 // pred_fallthru
          _
        // Predicated region
        $region21: #{tpu_custom_call.1} parent=11 // pred_check
          %p182 = pneg %p104
        $region22: #{tpu_custom_call.1} parent=11 // pred_check_branch
          %184 = sbr.rel (%p182) target = $region24
        $region23: #{tpu_custom_call.1} parent=11 // pred_region
          %s186 = ssub.s32 2048, 2048
          %187 = vsyncadd [#allocation5], %s186
          %s188 = sshll.u32 [#allocation6], 4
          %s189 = int_to_ptr.vmem [resolvable:$true] %s188
          %194 = dma.hbm_to_vmem [thread:$0]  %s3, 2048, %s189, [#allocation5], 64, 64, 4
        $region24: #{tpu_custom_call.1} parent=11 // pred_fallthru
          _
        // Predicated region
        $region25: #{tpu_custom_call.1} parent=11 // pred_check
          %p195 = pneg %p125
        $region26: #{tpu_custom_call.1} parent=11 // pred_check_branch
          %197 = sbr.rel (%p195) target = $region28
        $region27: #{tpu_custom_call.1} parent=11 // pred_region
          _
        $region28: #{tpu_custom_call.1} parent=11 // pred_fallthru
          _
      $region12: #{tpu_custom_call.1} parent=5 // pred_fallthru
        _
      %p198 = scmp.lt.s32.totalorder %s15, 2
      // Predicated region
      $region29: #{tpu_custom_call.1} parent=5 // pred_check
        %p199 = pneg %p198
      $region30: #{tpu_custom_call.1} parent=5 // pred_check_branch
        %201 = sbr.rel (%p199) target = $region32
      $region31: #{tpu_custom_call.1} parent=5 // pred_region
        // Predicated region
        $region33: #{tpu_custom_call.1} parent=31 // pred_check
          %p202 = pneg %p35
        $region34: #{tpu_custom_call.1} parent=31 // pred_check_branch
          %204 = sbr.rel (%p202) target = $region36
        $region35: #{tpu_custom_call.1} parent=31 // pred_region
          %s205 = sand.u32 %s25, 1
          %s206 = scalar_lea.sflag [#allocation3], %s205
          %s207 = sand.u32 %s25, 1
          %s208 = smul.addr %s207, 832
          %s209 = scalar_lea.vmem [#allocation2], %s208
          %s210 = smul.u32 13, %s15
          %s212 = ssub.s32 13312, 13312
          %213 = vsyncadd %s206, %s212
          %s214 = smul.addr %s210, 8
          %s215 = smul.addr %s214, 128
          %s216 = scalar_lea.hbm %s0, %s215
          %s217 = sshll.u32 %s209, 4
          %s218 = int_to_ptr.vmem [resolvable:$true] %s217
          %223 = dma.hbm_to_vmem [thread:$0]  %s216, 13312, %s218, %s206, 1024, 1024, 64
        $region36: #{tpu_custom_call.1} parent=31 // pred_fallthru
          _
      $region32: #{tpu_custom_call.1} parent=5 // pred_fallthru
        _
      %p224 = scmp.le.s32.totalorder 1, %s15
      %p225 = scmp.lt.s32.totalorder %s15, 3
      %p226 = pnand %p224, %p225
      %p227 = pneg %p226
      // Predicated region
      $region37: #{tpu_custom_call.1} parent=5 // pred_check
        _
      $region38: #{tpu_custom_call.1} parent=5 // pred_check_branch
        %229 = sbr.rel (%p226) target = $region40
      $region39: #{tpu_custom_call.1} parent=5 // pred_region
        %s230 = ssub.s32 %s15, 1
        %s231 = sand.u32 %s28, 1
        %s232 = scalar_lea.sflag [#allocation3], %s231
        %s233 = sand.u32 %s28, 1
        %s234 = smul.addr %s233, 832
        %s235 = scalar_lea.vmem [#allocation2], %s234
        // Predicated region
        $region41: #{tpu_custom_call.1} parent=39 // pred_check
          %p236 = pneg %p41
        $region42: #{tpu_custom_call.1} parent=39 // pred_check_branch
          %238 = sbr.rel (%p236) target = $region44
        $region43: #{tpu_custom_call.1} parent=39 // pred_region
          %239 = dma.done %s232, 13312
        $region44: #{tpu_custom_call.1} parent=39 // pred_fallthru
          _
        // Predicated region
        $region45: #{tpu_custom_call.1} parent=39 // pred_check
          %p240 = pneg %p62
        $region46: #{tpu_custom_call.1} parent=39 // pred_check_branch
          %242 = sbr.rel (%p240) target = $region48
        $region47: #{tpu_custom_call.1} parent=39 // pred_region
          %243 = dma.done [#allocation5], 16384
        $region48: #{tpu_custom_call.1} parent=39 // pred_fallthru
          _
        // Predicated region
        $region49: #{tpu_custom_call.1} parent=39 // pred_check
          %p244 = pneg %p104
        $region50: #{tpu_custom_call.1} parent=39 // pred_check_branch
          %246 = sbr.rel (%p244) target = $region52
        $region51: #{tpu_custom_call.1} parent=39 // pred_region
          %247 = dma.done [#allocation5], 2048
        $region52: #{tpu_custom_call.1} parent=39 // pred_fallthru
          _
        %s248 = sand.u32 %s28, 1
        %s249 = scalar_lea.sflag [#allocation3], %s248
        %s250 = sand.u32 %s28, 1
        %s251 = smul.addr %s250, 832
        %s252 = scalar_lea.vmem [#allocation2], %s251
        %p253 = pneg %p41
        %p254 = pneg %p38
        %p255 = pneg %p62
        %p256 = pneg %p59
        %p257 = pneg %p83
        %p258 = pneg %p80
        %p259 = pneg %p104
        %p260 = pneg %p101
        %p261 = pneg %p125
        %p262 = pneg %p122
        %p263 = pneg %p151
        %p264 = pneg %p148
        %s265 = smul.u32 13, %s20
        %p266 = scmp.lt.s32.totalorder %s265, 25
        %s267 = scalar_select %p266, %s265, 25
        %s268 = smul.addr %s267, 8
        %s269 = scalar_lea.vmem %s5, %s268
        %s270 = smul.u32 13, %s20
        %s271 = smul.u32 13, %s20
        %p272 = scmp.lt.s32.totalorder %s271, 25
        %s273 = scalar_select %p272, %s271, 25
        %s274 = smul.addr %s273, 8
        %s275 = scalar_lea.vmem %s5, %s274
        %s276 = smul.u32 13, %s20
        %v278 = vld [vmem:[%s235] sm:$0xff]
        %v279 = vld [vmem:[%s235 + $0x8] sm:$0xff]
        %v280 = vld [vmem:[%s235 + $0x10] sm:$0xff]
        %v281 = vld [vmem:[%s235 + $0x18] sm:$0xff]
        %v282 = vld [vmem:[%s235 + $0x20] sm:$0xff]
        %v283 = vld [vmem:[%s235 + $0x28] sm:$0xff]
        %v284 = vld [vmem:[%s235 + $0x30] sm:$0xff]
        %v285 = vld [vmem:[%s235 + $0x38] sm:$0xff]
        %v286 = vld [vmem:[%s235 + $0x40] sm:$0xff]
        %v287 = vld [vmem:[%s235 + $0x48] sm:$0xff]
        %v288 = vld [vmem:[%s235 + $0x50] sm:$0xff]
        %v289 = vld [vmem:[%s235 + $0x58] sm:$0xff]
        %v290 = vld [vmem:[%s235 + $0x60] sm:$0xff]
        %v291 = vld [vmem:[%s235 + $0x68] sm:$0xff]
        %v292 = vld [vmem:[%s235 + $0x70] sm:$0xff]
        %v293 = vld [vmem:[%s235 + $0x78] sm:$0xff]
        %v294 = vld [vmem:[%s235 + $0x80] sm:$0xff]
        %v295 = vld [vmem:[%s235 + $0x88] sm:$0xff]
        %v296 = vld [vmem:[%s235 + $0x90] sm:$0xff]
        %v297 = vld [vmem:[%s235 + $0x98] sm:$0xff]
        %v298 = vld [vmem:[%s235 + $0xa0] sm:$0xff]
        %v299 = vld [vmem:[%s235 + $0xa8] sm:$0xff]
        %v300 = vld [vmem:[%s235 + $0xb0] sm:$0xff]
        %v301 = vld [vmem:[%s235 + $0xb8] sm:$0xff]
        %v302 = vld [vmem:[%s235 + $0xc0] sm:$0xff]
        %v303 = vld [vmem:[%s235 + $0xc8] sm:$0xff]
        %v304 = vld [vmem:[%s235 + $0xd0] sm:$0xff]
        %v305 = vld [vmem:[%s235 + $0xd8] sm:$0xff]
        %v306 = vld [vmem:[%s235 + $0xe0] sm:$0xff]
        %v307 = vld [vmem:[%s235 + $0xe8] sm:$0xff]
        %v308 = vld [vmem:[%s235 + $0xf0] sm:$0xff]
        %v309 = vld [vmem:[%s235 + $0xf8] sm:$0xff]
        %v310 = vld [vmem:[%s235 + $0x100] sm:$0xff]
        %v311 = vld [vmem:[%s235 + $0x108] sm:$0xff]
        %v312 = vld [vmem:[%s235 + $0x110] sm:$0xff]
        %v313 = vld [vmem:[%s235 + $0x118] sm:$0xff]
        %v314 = vld [vmem:[%s235 + $0x120] sm:$0xff]
        %v315 = vld [vmem:[%s235 + $0x128] sm:$0xff]
        %v316 = vld [vmem:[%s235 + $0x130] sm:$0xff]
        %v317 = vld [vmem:[%s235 + $0x138] sm:$0xff]
        %v318 = vld [vmem:[%s235 + $0x140] sm:$0xff]
        %v319 = vld [vmem:[%s235 + $0x148] sm:$0xff]
        %v320 = vld [vmem:[%s235 + $0x150] sm:$0xff]
        %v321 = vld [vmem:[%s235 + $0x158] sm:$0xff]
        %v322 = vld [vmem:[%s235 + $0x160] sm:$0xff]
        %v323 = vld [vmem:[%s235 + $0x168] sm:$0xff]
        %v324 = vld [vmem:[%s235 + $0x170] sm:$0xff]
        %v325 = vld [vmem:[%s235 + $0x178] sm:$0xff]
        %v326 = vld [vmem:[%s235 + $0x180] sm:$0xff]
        %v327 = vld [vmem:[%s235 + $0x188] sm:$0xff]
        %v328 = vld [vmem:[%s235 + $0x190] sm:$0xff]
        %v329 = vld [vmem:[%s235 + $0x198] sm:$0xff]
        %v330 = vld [vmem:[%s235 + $0x1a0] sm:$0xff]
        %v331 = vld [vmem:[%s235 + $0x1a8] sm:$0xff]
        %v332 = vld [vmem:[%s235 + $0x1b0] sm:$0xff]
        %v333 = vld [vmem:[%s235 + $0x1b8] sm:$0xff]
        %v334 = vld [vmem:[%s235 + $0x1c0] sm:$0xff]
        %v335 = vld [vmem:[%s235 + $0x1c8] sm:$0xff]
        %v336 = vld [vmem:[%s235 + $0x1d0] sm:$0xff]
        %v337 = vld [vmem:[%s235 + $0x1d8] sm:$0xff]
        %v338 = vld [vmem:[%s235 + $0x1e0] sm:$0xff]
        %v339 = vld [vmem:[%s235 + $0x1e8] sm:$0xff]
        %v340 = vld [vmem:[%s235 + $0x1f0] sm:$0xff]
        %v341 = vld [vmem:[%s235 + $0x1f8] sm:$0xff]
        %v342 = vld [vmem:[%s235 + $0x200] sm:$0xff]
        %v343 = vld [vmem:[%s235 + $0x208] sm:$0xff]
        %v344 = vld [vmem:[%s235 + $0x210] sm:$0xff]
        %v345 = vld [vmem:[%s235 + $0x218] sm:$0xff]
        %v346 = vld [vmem:[%s235 + $0x220] sm:$0xff]
        %v347 = vld [vmem:[%s235 + $0x228] sm:$0xff]
        %v348 = vld [vmem:[%s235 + $0x230] sm:$0xff]
        %v349 = vld [vmem:[%s235 + $0x238] sm:$0xff]
        %v350 = vld [vmem:[%s235 + $0x240] sm:$0xff]
        %v351 = vld [vmem:[%s235 + $0x248] sm:$0xff]
        %v352 = vld [vmem:[%s235 + $0x250] sm:$0xff]
        %v353 = vld [vmem:[%s235 + $0x258] sm:$0xff]
        %v354 = vld [vmem:[%s235 + $0x260] sm:$0xff]
        %v355 = vld [vmem:[%s235 + $0x268] sm:$0xff]
        %v356 = vld [vmem:[%s235 + $0x270] sm:$0xff]
        %v357 = vld [vmem:[%s235 + $0x278] sm:$0xff]
        %v358 = vld [vmem:[%s235 + $0x280] sm:$0xff]
        %v359 = vld [vmem:[%s235 + $0x288] sm:$0xff]
        %v360 = vld [vmem:[%s235 + $0x290] sm:$0xff]
        %v361 = vld [vmem:[%s235 + $0x298] sm:$0xff]
        %v362 = vld [vmem:[%s235 + $0x2a0] sm:$0xff]
        %v363 = vld [vmem:[%s235 + $0x2a8] sm:$0xff]
        %v364 = vld [vmem:[%s235 + $0x2b0] sm:$0xff]
        %v365 = vld [vmem:[%s235 + $0x2b8] sm:$0xff]
        %v366 = vld [vmem:[%s235 + $0x2c0] sm:$0xff]
        %v367 = vld [vmem:[%s235 + $0x2c8] sm:$0xff]
        %v368 = vld [vmem:[%s235 + $0x2d0] sm:$0xff]
        %v369 = vld [vmem:[%s235 + $0x2d8] sm:$0xff]
        %v370 = vld [vmem:[%s235 + $0x2e0] sm:$0xff]
        %v371 = vld [vmem:[%s235 + $0x2e8] sm:$0xff]
        %v372 = vld [vmem:[%s235 + $0x2f0] sm:$0xff]
        %v373 = vld [vmem:[%s235 + $0x2f8] sm:$0xff]
        %v374 = vld [vmem:[%s235 + $0x300] sm:$0xff]
        %v375 = vld [vmem:[%s235 + $0x308] sm:$0xff]
        %v376 = vld [vmem:[%s235 + $0x310] sm:$0xff]
        %v377 = vld [vmem:[%s235 + $0x318] sm:$0xff]
        %v378 = vld [vmem:[%s235 + $0x320] sm:$0xff]
        %v379 = vld [vmem:[%s235 + $0x328] sm:$0xff]
        %v380 = vld [vmem:[%s235 + $0x330] sm:$0xff]
        %v381 = vld [vmem:[%s235 + $0x338] sm:$0xff]
        %v382 = vpack.c.bf16 %v286, %v278
        %v383 = vpack.c.bf16 %v287, %v279
        %v384 = vpack.c.bf16 %v288, %v280
        %v385 = vpack.c.bf16 %v289, %v281
        %v386 = vpack.c.bf16 %v290, %v282
        %v387 = vpack.c.bf16 %v291, %v283
        %v388 = vpack.c.bf16 %v292, %v284
        %v389 = vpack.c.bf16 %v293, %v285
        %v390 = vpack.c.bf16 %v302, %v294
        %v391 = vpack.c.bf16 %v303, %v295
        %v392 = vpack.c.bf16 %v304, %v296
        %v393 = vpack.c.bf16 %v305, %v297
        %v394 = vpack.c.bf16 %v306, %v298
        %v395 = vpack.c.bf16 %v307, %v299
        %v396 = vpack.c.bf16 %v308, %v300
        %v397 = vpack.c.bf16 %v309, %v301
        %v398 = vpack.c.bf16 %v318, %v310
        %v399 = vpack.c.bf16 %v319, %v311
        %v400 = vpack.c.bf16 %v320, %v312
        %v401 = vpack.c.bf16 %v321, %v313
        %v402 = vpack.c.bf16 %v322, %v314
        %v403 = vpack.c.bf16 %v323, %v315
        %v404 = vpack.c.bf16 %v324, %v316
        %v405 = vpack.c.bf16 %v325, %v317
        %v406 = vpack.c.bf16 %v334, %v326
        %v407 = vpack.c.bf16 %v335, %v327
        %v408 = vpack.c.bf16 %v336, %v328
        %v409 = vpack.c.bf16 %v337, %v329
        %v410 = vpack.c.bf16 %v338, %v330
        %v411 = vpack.c.bf16 %v339, %v331
        %v412 = vpack.c.bf16 %v340, %v332
        %v413 = vpack.c.bf16 %v341, %v333
        %v414 = vpack.c.bf16 %v350, %v342
        %v415 = vpack.c.bf16 %v351, %v343
        %v416 = vpack.c.bf16 %v352, %v344
        %v417 = vpack.c.bf16 %v353, %v345
        %v418 = vpack.c.bf16 %v354, %v346
        %v419 = vpack.c.bf16 %v355, %v347
        %v420 = vpack.c.bf16 %v356, %v348
        %v421 = vpack.c.bf16 %v357, %v349
        %v422 = vpack.c.bf16 %v366, %v358
        %v423 = vpack.c.bf16 %v367, %v359
        %v424 = vpack.c.bf16 %v368, %v360
        %v425 = vpack.c.bf16 %v369, %v361
        %v426 = vpack.c.bf16 %v370, %v362
        %v427 = vpack.c.bf16 %v371, %v363
        %v428 = vpack.c.bf16 %v372, %v364
        %v429 = vpack.c.bf16 %v373, %v365
        %v430 = vpack.c.bf16 %v374, %v374
        %v431 = vpack.c.bf16 %v375, %v375
        %v432 = vpack.c.bf16 %v376, %v376
        %v433 = vpack.c.bf16 %v377, %v377
        %v434 = vpack.c.bf16 %v378, %v378
        %v435 = vpack.c.bf16 %v379, %v379
        %v436 = vpack.c.bf16 %v380, %v380
        %v437 = vpack.c.bf16 %v381, %v381
        %v438 = vld [vmem:[#allocation4] sm:$0xff]
        %v439 = vld [vmem:[#allocation4 + $0x8] sm:$0xff]
        %v440 = vld [vmem:[#allocation4 + $0x10] sm:$0xff]
        %v441 = vld [vmem:[#allocation4 + $0x18] sm:$0xff]
        %v442 = vld [vmem:[#allocation4 + $0x20] sm:$0xff]
        %v443 = vld [vmem:[#allocation4 + $0x28] sm:$0xff]
        %v444 = vld [vmem:[#allocation4 + $0x30] sm:$0xff]
        %v445 = vld [vmem:[#allocation4 + $0x38] sm:$0xff]
        %v446 = vld [vmem:[#allocation4 + $0x40] sm:$0xff]
        %v447 = vld [vmem:[#allocation4 + $0x48] sm:$0xff]
        %v448 = vld [vmem:[#allocation4 + $0x50] sm:$0xff]
        %v449 = vld [vmem:[#allocation4 + $0x58] sm:$0xff]
        %v450 = vld [vmem:[#allocation4 + $0x60] sm:$0xff]
        %v451 = vld [vmem:[#allocation4 + $0x68] sm:$0xff]
        %v452 = vld [vmem:[#allocation4 + $0x70] sm:$0xff]
        %v453 = vld [vmem:[#allocation4 + $0x78] sm:$0xff]
        %v454 = vld [vmem:[#allocation4 + $0x80] sm:$0xff]
        %v455 = vld [vmem:[#allocation4 + $0x88] sm:$0xff]
        %v456 = vld [vmem:[#allocation4 + $0x90] sm:$0xff]
        %v457 = vld [vmem:[#allocation4 + $0x98] sm:$0xff]
        %v458 = vld [vmem:[#allocation4 + $0xa0] sm:$0xff]
        %v459 = vld [vmem:[#allocation4 + $0xa8] sm:$0xff]
        %v460 = vld [vmem:[#allocation4 + $0xb0] sm:$0xff]
        %v461 = vld [vmem:[#allocation4 + $0xb8] sm:$0xff]
        %v462 = vld [vmem:[#allocation4 + $0xc0] sm:$0xff]
        %v463 = vld [vmem:[#allocation4 + $0xc8] sm:$0xff]
        %v464 = vld [vmem:[#allocation4 + $0xd0] sm:$0xff]
        %v465 = vld [vmem:[#allocation4 + $0xd8] sm:$0xff]
        %v466 = vld [vmem:[#allocation4 + $0xe0] sm:$0xff]
        %v467 = vld [vmem:[#allocation4 + $0xe8] sm:$0xff]
        %v468 = vld [vmem:[#allocation4 + $0xf0] sm:$0xff]
        %v469 = vld [vmem:[#allocation4 + $0xf8] sm:$0xff]
        %v470 = vld [vmem:[#allocation4 + $0x100] sm:$0xff]
        %v471 = vld [vmem:[#allocation4 + $0x108] sm:$0xff]
        %v472 = vld [vmem:[#allocation4 + $0x110] sm:$0xff]
        %v473 = vld [vmem:[#allocation4 + $0x118] sm:$0xff]
        %v474 = vld [vmem:[#allocation4 + $0x120] sm:$0xff]
        %v475 = vld [vmem:[#allocation4 + $0x128] sm:$0xff]
        %v476 = vld [vmem:[#allocation4 + $0x130] sm:$0xff]
        %v477 = vld [vmem:[#allocation4 + $0x138] sm:$0xff]
        %v478 = vld [vmem:[#allocation4 + $0x140] sm:$0xff]
        %v479 = vld [vmem:[#allocation4 + $0x148] sm:$0xff]
        %v480 = vld [vmem:[#allocation4 + $0x150] sm:$0xff]
        %v481 = vld [vmem:[#allocation4 + $0x158] sm:$0xff]
        %v482 = vld [vmem:[#allocation4 + $0x160] sm:$0xff]
        %v483 = vld [vmem:[#allocation4 + $0x168] sm:$0xff]
        %v484 = vld [vmem:[#allocation4 + $0x170] sm:$0xff]
        %v485 = vld [vmem:[#allocation4 + $0x178] sm:$0xff]
        %v486 = vld [vmem:[#allocation4 + $0x180] sm:$0xff]
        %v487 = vld [vmem:[#allocation4 + $0x188] sm:$0xff]
        %v488 = vld [vmem:[#allocation4 + $0x190] sm:$0xff]
        %v489 = vld [vmem:[#allocation4 + $0x198] sm:$0xff]
        %v490 = vld [vmem:[#allocation4 + $0x1a0] sm:$0xff]
        %v491 = vld [vmem:[#allocation4 + $0x1a8] sm:$0xff]
        %v492 = vld [vmem:[#allocation4 + $0x1b0] sm:$0xff]
        %v493 = vld [vmem:[#allocation4 + $0x1b8] sm:$0xff]
        %v494 = vld [vmem:[#allocation4 + $0x1c0] sm:$0xff]
        %v495 = vld [vmem:[#allocation4 + $0x1c8] sm:$0xff]
        %v496 = vld [vmem:[#allocation4 + $0x1d0] sm:$0xff]
        %v497 = vld [vmem:[#allocation4 + $0x1d8] sm:$0xff]
        %v498 = vld [vmem:[#allocation4 + $0x1e0] sm:$0xff]
        %v499 = vld [vmem:[#allocation4 + $0x1e8] sm:$0xff]
        %v500 = vld [vmem:[#allocation4 + $0x1f0] sm:$0xff]
        %v501 = vld [vmem:[#allocation4 + $0x1f8] sm:$0xff]
        %v502 = vld [vmem:[#allocation4 + $0x200] sm:$0xff]
        %v503 = vld [vmem:[#allocation4 + $0x208] sm:$0xff]
        %v504 = vld [vmem:[#allocation4 + $0x210] sm:$0xff]
        %v505 = vld [vmem:[#allocation4 + $0x218] sm:$0xff]
        %v506 = vld [vmem:[#allocation4 + $0x220] sm:$0xff]
        %v507 = vld [vmem:[#allocation4 + $0x228] sm:$0xff]
        %v508 = vld [vmem:[#allocation4 + $0x230] sm:$0xff]
        %v509 = vld [vmem:[#allocation4 + $0x238] sm:$0xff]
        %v510 = vld [vmem:[#allocation4 + $0x240] sm:$0xff]
        %v511 = vld [vmem:[#allocation4 + $0x248] sm:$0xff]
        %v512 = vld [vmem:[#allocation4 + $0x250] sm:$0xff]
        %v513 = vld [vmem:[#allocation4 + $0x258] sm:$0xff]
        %v514 = vld [vmem:[#allocation4 + $0x260] sm:$0xff]
        %v515 = vld [vmem:[#allocation4 + $0x268] sm:$0xff]
        %v516 = vld [vmem:[#allocation4 + $0x270] sm:$0xff]
        %v517 = vld [vmem:[#allocation4 + $0x278] sm:$0xff]
        %v518 = vld [vmem:[#allocation4 + $0x280] sm:$0xff]
        %v519 = vld [vmem:[#allocation4 + $0x288] sm:$0xff]
        %v520 = vld [vmem:[#allocation4 + $0x290] sm:$0xff]
        %v521 = vld [vmem:[#allocation4 + $0x298] sm:$0xff]
        %v522 = vld [vmem:[#allocation4 + $0x2a0] sm:$0xff]
        %v523 = vld [vmem:[#allocation4 + $0x2a8] sm:$0xff]
        %v524 = vld [vmem:[#allocation4 + $0x2b0] sm:$0xff]
        %v525 = vld [vmem:[#allocation4 + $0x2b8] sm:$0xff]
        %v526 = vld [vmem:[#allocation4 + $0x2c0] sm:$0xff]
        %v527 = vld [vmem:[#allocation4 + $0x2c8] sm:$0xff]
        %v528 = vld [vmem:[#allocation4 + $0x2d0] sm:$0xff]
        %v529 = vld [vmem:[#allocation4 + $0x2d8] sm:$0xff]
        %v530 = vld [vmem:[#allocation4 + $0x2e0] sm:$0xff]
        %v531 = vld [vmem:[#allocation4 + $0x2e8] sm:$0xff]
        %v532 = vld [vmem:[#allocation4 + $0x2f0] sm:$0xff]
        %v533 = vld [vmem:[#allocation4 + $0x2f8] sm:$0xff]
        %v534 = vld [vmem:[#allocation4 + $0x300] sm:$0xff]
        %v535 = vld [vmem:[#allocation4 + $0x308] sm:$0xff]
        %v536 = vld [vmem:[#allocation4 + $0x310] sm:$0xff]
        %v537 = vld [vmem:[#allocation4 + $0x318] sm:$0xff]
        %v538 = vld [vmem:[#allocation4 + $0x320] sm:$0xff]
        %v539 = vld [vmem:[#allocation4 + $0x328] sm:$0xff]
        %v540 = vld [vmem:[#allocation4 + $0x330] sm:$0xff]
        %v541 = vld [vmem:[#allocation4 + $0x338] sm:$0xff]
        %v542 = vld [vmem:[#allocation4 + $0x340] sm:$0xff]
        %v543 = vld [vmem:[#allocation4 + $0x348] sm:$0xff]
        %v544 = vld [vmem:[#allocation4 + $0x350] sm:$0xff]
        %v545 = vld [vmem:[#allocation4 + $0x358] sm:$0xff]
        %v546 = vld [vmem:[#allocation4 + $0x360] sm:$0xff]
        %v547 = vld [vmem:[#allocation4 + $0x368] sm:$0xff]
        %v548 = vld [vmem:[#allocation4 + $0x370] sm:$0xff]
        %v549 = vld [vmem:[#allocation4 + $0x378] sm:$0xff]
        %v550 = vld [vmem:[#allocation4 + $0x380] sm:$0xff]
        %v551 = vld [vmem:[#allocation4 + $0x388] sm:$0xff]
        %v552 = vld [vmem:[#allocation4 + $0x390] sm:$0xff]
        %v553 = vld [vmem:[#allocation4 + $0x398] sm:$0xff]
        %v554 = vld [vmem:[#allocation4 + $0x3a0] sm:$0xff]
        %v555 = vld [vmem:[#allocation4 + $0x3a8] sm:$0xff]
        %v556 = vld [vmem:[#allocation4 + $0x3b0] sm:$0xff]
        %v557 = vld [vmem:[#allocation4 + $0x3b8] sm:$0xff]
        %v558 = vld [vmem:[#allocation4 + $0x3c0] sm:$0xff]
        %v559 = vld [vmem:[#allocation4 + $0x3c8] sm:$0xff]
        %v560 = vld [vmem:[#allocation4 + $0x3d0] sm:$0xff]
        %v561 = vld [vmem:[#allocation4 + $0x3d8] sm:$0xff]
        %v562 = vld [vmem:[#allocation4 + $0x3e0] sm:$0xff]
        %v563 = vld [vmem:[#allocation4 + $0x3e8] sm:$0xff]
        %v564 = vld [vmem:[#allocation4 + $0x3f0] sm:$0xff]
        %v565 = vld [vmem:[#allocation4 + $0x3f8] sm:$0xff]
        %v566 = vld [vmem:[%s2] sm:$0x3]
        %v568 = vlaneseq
        %v569 = vshrl.u32 %v568, 7
        %v570 = vsub.s32 0, %v569
        %v571 = vrot.slane %v566, %v570
        %v572 = vlaneseq
        %v573 = vshrl.u32 %v572, 7
        %v574 = vsub.s32 1, %v573
        %v575 = vrot.slane %v566, %v574
        %v706 = vunpack.c.l.b16 %v438
        %v707 = vunpack.c.h.b16 %v438
        %v708 = vunpack.c.l.b16 %v439
        %v709 = vunpack.c.h.b16 %v439
        %v710 = vunpack.c.l.b16 %v440
        %v711 = vunpack.c.h.b16 %v440
        %v712 = vunpack.c.l.b16 %v441
        %v713 = vunpack.c.h.b16 %v441
        %v714 = vunpack.c.l.b16 %v442
        %v715 = vunpack.c.h.b16 %v442
        %v716 = vunpack.c.l.b16 %v443
        %v717 = vunpack.c.h.b16 %v443
        %v718 = vunpack.c.l.b16 %v444
        %v719 = vunpack.c.h.b16 %v444
        %v720 = vunpack.c.l.b16 %v445
        %v721 = vunpack.c.h.b16 %v445
        %v722 = vunpack.c.l.b16 %v446
        %v723 = vunpack.c.h.b16 %v446
        %v724 = vunpack.c.l.b16 %v447
        %v725 = vunpack.c.h.b16 %v447
        %v726 = vunpack.c.l.b16 %v448
        %v727 = vunpack.c.h.b16 %v448
        %v728 = vunpack.c.l.b16 %v449
        %v729 = vunpack.c.h.b16 %v449
        %v730 = vunpack.c.l.b16 %v450
        %v731 = vunpack.c.h.b16 %v450
        %v732 = vunpack.c.l.b16 %v451
        %v733 = vunpack.c.h.b16 %v451
        %v734 = vunpack.c.l.b16 %v452
        %v735 = vunpack.c.h.b16 %v452
        %v736 = vunpack.c.l.b16 %v453
        %v737 = vunpack.c.h.b16 %v453
        %v738 = vunpack.c.l.b16 %v454
        %v739 = vunpack.c.h.b16 %v454
        %v740 = vunpack.c.l.b16 %v455
        %v741 = vunpack.c.h.b16 %v455
        %v742 = vunpack.c.l.b16 %v456
        %v743 = vunpack.c.h.b16 %v456
        %v744 = vunpack.c.l.b16 %v457
        %v745 = vunpack.c.h.b16 %v457
        %v746 = vunpack.c.l.b16 %v458
        %v747 = vunpack.c.h.b16 %v458
        %v748 = vunpack.c.l.b16 %v459
        %v749 = vunpack.c.h.b16 %v459
        %v750 = vunpack.c.l.b16 %v460
        %v751 = vunpack.c.h.b16 %v460
        %v752 = vunpack.c.l.b16 %v461
        %v753 = vunpack.c.h.b16 %v461
        %v754 = vunpack.c.l.b16 %v462
        %v755 = vunpack.c.h.b16 %v462
        %v756 = vunpack.c.l.b16 %v463
        %v757 = vunpack.c.h.b16 %v463
        %v758 = vunpack.c.l.b16 %v464
        %v759 = vunpack.c.h.b16 %v464
        %v760 = vunpack.c.l.b16 %v465
        %v761 = vunpack.c.h.b16 %v465
        %v762 = vunpack.c.l.b16 %v466
        %v763 = vunpack.c.h.b16 %v466
        %v764 = vunpack.c.l.b16 %v467
        %v765 = vunpack.c.h.b16 %v467
        %v766 = vunpack.c.l.b16 %v468
        %v767 = vunpack.c.h.b16 %v468
        %v768 = vunpack.c.l.b16 %v469
        %v769 = vunpack.c.h.b16 %v469
        %v770 = vunpack.c.l.b16 %v470
        %v771 = vunpack.c.h.b16 %v470
        %v772 = vunpack.c.l.b16 %v471
        %v773 = vunpack.c.h.b16 %v471
        %v774 = vunpack.c.l.b16 %v472
        %v775 = vunpack.c.h.b16 %v472
        %v776 = vunpack.c.l.b16 %v473
        %v777 = vunpack.c.h.b16 %v473
        %v778 = vunpack.c.l.b16 %v474
        %v779 = vunpack.c.h.b16 %v474
        %v780 = vunpack.c.l.b16 %v475
        %v781 = vunpack.c.h.b16 %v475
        %v782 = vunpack.c.l.b16 %v476
        %v783 = vunpack.c.h.b16 %v476
        %v784 = vunpack.c.l.b16 %v477
        %v785 = vunpack.c.h.b16 %v477
        %v786 = vunpack.c.l.b16 %v478
        %v787 = vunpack.c.h.b16 %v478
        %v788 = vunpack.c.l.b16 %v479
        %v789 = vunpack.c.h.b16 %v479
        %v790 = vunpack.c.l.b16 %v480
        %v791 = vunpack.c.h.b16 %v480
        %v792 = vunpack.c.l.b16 %v481
        %v793 = vunpack.c.h.b16 %v481
        %v794 = vunpack.c.l.b16 %v482
        %v795 = vunpack.c.h.b16 %v482
        %v796 = vunpack.c.l.b16 %v483
        %v797 = vunpack.c.h.b16 %v483
        %v798 = vunpack.c.l.b16 %v484
        %v799 = vunpack.c.h.b16 %v484
        %v800 = vunpack.c.l.b16 %v485
        %v801 = vunpack.c.h.b16 %v485
        %v802 = vunpack.c.l.b16 %v486
        %v803 = vunpack.c.h.b16 %v486
        %v804 = vunpack.c.l.b16 %v487
        %v805 = vunpack.c.h.b16 %v487
        %v806 = vunpack.c.l.b16 %v488
        %v807 = vunpack.c.h.b16 %v488
        %v808 = vunpack.c.l.b16 %v489
        %v809 = vunpack.c.h.b16 %v489
        %v810 = vunpack.c.l.b16 %v490
        %v811 = vunpack.c.h.b16 %v490
        %v812 = vunpack.c.l.b16 %v491
        %v813 = vunpack.c.h.b16 %v491
        %v814 = vunpack.c.l.b16 %v492
        %v815 = vunpack.c.h.b16 %v492
        %v816 = vunpack.c.l.b16 %v493
        %v817 = vunpack.c.h.b16 %v493
        %v818 = vunpack.c.l.b16 %v494
        %v819 = vunpack.c.h.b16 %v494
        %v820 = vunpack.c.l.b16 %v495
        %v821 = vunpack.c.h.b16 %v495
        %v822 = vunpack.c.l.b16 %v496
        %v823 = vunpack.c.h.b16 %v496
        %v824 = vunpack.c.l.b16 %v497
        %v825 = vunpack.c.h.b16 %v497
        %v826 = vunpack.c.l.b16 %v498
        %v827 = vunpack.c.h.b16 %v498
        %v828 = vunpack.c.l.b16 %v499
        %v829 = vunpack.c.h.b16 %v499
        %v830 = vunpack.c.l.b16 %v500
        %v831 = vunpack.c.h.b16 %v500
        %v832 = vunpack.c.l.b16 %v501
        %v833 = vunpack.c.h.b16 %v501
        %v834 = vunpack.c.l.b16 %v502
        %v835 = vunpack.c.h.b16 %v502
        %v836 = vunpack.c.l.b16 %v503
        %v837 = vunpack.c.h.b16 %v503
        %v838 = vunpack.c.l.b16 %v504
        %v839 = vunpack.c.h.b16 %v504
        %v840 = vunpack.c.l.b16 %v505
        %v841 = vunpack.c.h.b16 %v505
        %v842 = vunpack.c.l.b16 %v506
        %v843 = vunpack.c.h.b16 %v506
        %v844 = vunpack.c.l.b16 %v507
        %v845 = vunpack.c.h.b16 %v507
        %v846 = vunpack.c.l.b16 %v508
        %v847 = vunpack.c.h.b16 %v508
        %v848 = vunpack.c.l.b16 %v509
        %v849 = vunpack.c.h.b16 %v509
        %v850 = vunpack.c.l.b16 %v510
        %v851 = vunpack.c.h.b16 %v510
        %v852 = vunpack.c.l.b16 %v511
        %v853 = vunpack.c.h.b16 %v511
        %v854 = vunpack.c.l.b16 %v512
        %v855 = vunpack.c.h.b16 %v512
        %v856 = vunpack.c.l.b16 %v513
        %v857 = vunpack.c.h.b16 %v513
        %v858 = vunpack.c.l.b16 %v514
        %v859 = vunpack.c.h.b16 %v514
        %v860 = vunpack.c.l.b16 %v515
        %v861 = vunpack.c.h.b16 %v515
        %v862 = vunpack.c.l.b16 %v516
        %v863 = vunpack.c.h.b16 %v516
        %v864 = vunpack.c.l.b16 %v517
        %v865 = vunpack.c.h.b16 %v517
        %v866 = vunpack.c.l.b16 %v518
        %v867 = vunpack.c.h.b16 %v518
        %v868 = vunpack.c.l.b16 %v519
        %v869 = vunpack.c.h.b16 %v519
        %v870 = vunpack.c.l.b16 %v520
        %v871 = vunpack.c.h.b16 %v520
        %v872 = vunpack.c.l.b16 %v521
        %v873 = vunpack.c.h.b16 %v521
        %v874 = vunpack.c.l.b16 %v522
        %v875 = vunpack.c.h.b16 %v522
        %v876 = vunpack.c.l.b16 %v523
        %v877 = vunpack.c.h.b16 %v523
        %v878 = vunpack.c.l.b16 %v524
        %v879 = vunpack.c.h.b16 %v524
        %v880 = vunpack.c.l.b16 %v525
        %v881 = vunpack.c.h.b16 %v525
        %v882 = vunpack.c.l.b16 %v526
        %v883 = vunpack.c.h.b16 %v526
        %v884 = vunpack.c.l.b16 %v527
        %v885 = vunpack.c.h.b16 %v527
        %v886 = vunpack.c.l.b16 %v528
        %v887 = vunpack.c.h.b16 %v528
        %v888 = vunpack.c.l.b16 %v529
        %v889 = vunpack.c.h.b16 %v529
        %v890 = vunpack.c.l.b16 %v530
        %v891 = vunpack.c.h.b16 %v530
        %v892 = vunpack.c.l.b16 %v531
        %v893 = vunpack.c.h.b16 %v531
        %v894 = vunpack.c.l.b16 %v532
        %v895 = vunpack.c.h.b16 %v532
        %v896 = vunpack.c.l.b16 %v533
        %v897 = vunpack.c.h.b16 %v533
        %v898 = vunpack.c.l.b16 %v534
        %v899 = vunpack.c.h.b16 %v534
        %v900 = vunpack.c.l.b16 %v535
        %v901 = vunpack.c.h.b16 %v535
        %v902 = vunpack.c.l.b16 %v536
        %v903 = vunpack.c.h.b16 %v536
        %v904 = vunpack.c.l.b16 %v537
        %v905 = vunpack.c.h.b16 %v537
        %v906 = vunpack.c.l.b16 %v538
        %v907 = vunpack.c.h.b16 %v538
        %v908 = vunpack.c.l.b16 %v539
        %v909 = vunpack.c.h.b16 %v539
        %v910 = vunpack.c.l.b16 %v540
        %v911 = vunpack.c.h.b16 %v540
        %v912 = vunpack.c.l.b16 %v541
        %v913 = vunpack.c.h.b16 %v541
        %v914 = vunpack.c.l.b16 %v542
        %v915 = vunpack.c.h.b16 %v542
        %v916 = vunpack.c.l.b16 %v543
        %v917 = vunpack.c.h.b16 %v543
        %v918 = vunpack.c.l.b16 %v544
        %v919 = vunpack.c.h.b16 %v544
        %v920 = vunpack.c.l.b16 %v545
        %v921 = vunpack.c.h.b16 %v545
        %v922 = vunpack.c.l.b16 %v546
        %v923 = vunpack.c.h.b16 %v546
        %v924 = vunpack.c.l.b16 %v547
        %v925 = vunpack.c.h.b16 %v547
        %v926 = vunpack.c.l.b16 %v548
        %v927 = vunpack.c.h.b16 %v548
        %v928 = vunpack.c.l.b16 %v549
        %v929 = vunpack.c.h.b16 %v549
        %v930 = vunpack.c.l.b16 %v550
        %v931 = vunpack.c.h.b16 %v550
        %v932 = vunpack.c.l.b16 %v551
        %v933 = vunpack.c.h.b16 %v551
        %v934 = vunpack.c.l.b16 %v552
        %v935 = vunpack.c.h.b16 %v552
        %v936 = vunpack.c.l.b16 %v553
        %v937 = vunpack.c.h.b16 %v553
        %v938 = vunpack.c.l.b16 %v554
        %v939 = vunpack.c.h.b16 %v554
        %v940 = vunpack.c.l.b16 %v555
        %v941 = vunpack.c.h.b16 %v555
        %v942 = vunpack.c.l.b16 %v556
        %v943 = vunpack.c.h.b16 %v556
        %v944 = vunpack.c.l.b16 %v557
        %v945 = vunpack.c.h.b16 %v557
        %v946 = vunpack.c.l.b16 %v558
        %v947 = vunpack.c.h.b16 %v558
        %v948 = vunpack.c.l.b16 %v559
        %v949 = vunpack.c.h.b16 %v559
        %v950 = vunpack.c.l.b16 %v560
        %v951 = vunpack.c.h.b16 %v560
        %v952 = vunpack.c.l.b16 %v561
        %v953 = vunpack.c.h.b16 %v561
        %v954 = vunpack.c.l.b16 %v562
        %v955 = vunpack.c.h.b16 %v562
        %v956 = vunpack.c.l.b16 %v563
        %v957 = vunpack.c.h.b16 %v563
        %v958 = vunpack.c.l.b16 %v564
        %v959 = vunpack.c.h.b16 %v564
        %v960 = vunpack.c.l.b16 %v565
        %v961 = vunpack.c.h.b16 %v565
        %v962 = vpack.c.b16 %v708, %v706
        %v963 = vpack.c.b16 %v709, %v707
        %v964 = vpack.c.b16 %v712, %v710
        %v965 = vpack.c.b16 %v713, %v711
        %v966 = vpack.c.b16 %v716, %v714
        %v967 = vpack.c.b16 %v717, %v715
        %v968 = vpack.c.b16 %v720, %v718
        %v969 = vpack.c.b16 %v721, %v719
        %v970 = vpack.c.b16 %v724, %v722
        %v971 = vpack.c.b16 %v725, %v723
        %v972 = vpack.c.b16 %v728, %v726
        %v973 = vpack.c.b16 %v729, %v727
        %v974 = vpack.c.b16 %v732, %v730
        %v975 = vpack.c.b16 %v733, %v731
        %v976 = vpack.c.b16 %v736, %v734
        %v977 = vpack.c.b16 %v737, %v735
        %v978 = vpack.c.b16 %v740, %v738
        %v979 = vpack.c.b16 %v741, %v739
        %v980 = vpack.c.b16 %v744, %v742
        %v981 = vpack.c.b16 %v745, %v743
        %v982 = vpack.c.b16 %v748, %v746
        %v983 = vpack.c.b16 %v749, %v747
        %v984 = vpack.c.b16 %v752, %v750
        %v985 = vpack.c.b16 %v753, %v751
        %v986 = vpack.c.b16 %v756, %v754
        %v987 = vpack.c.b16 %v757, %v755
        %v988 = vpack.c.b16 %v760, %v758
        %v989 = vpack.c.b16 %v761, %v759
        %v990 = vpack.c.b16 %v764, %v762
        %v991 = vpack.c.b16 %v765, %v763
        %v992 = vpack.c.b16 %v768, %v766
        %v993 = vpack.c.b16 %v769, %v767
        %v994 = vpack.c.b16 %v772, %v770
        %v995 = vpack.c.b16 %v773, %v771
        %v996 = vpack.c.b16 %v776, %v774
        %v997 = vpack.c.b16 %v777, %v775
        %v998 = vpack.c.b16 %v780, %v778
        %v999 = vpack.c.b16 %v781, %v779
        %v1000 = vpack.c.b16 %v784, %v782
        %v1001 = vpack.c.b16 %v785, %v783
        %v1002 = vpack.c.b16 %v788, %v786
        %v1003 = vpack.c.b16 %v789, %v787
        %v1004 = vpack.c.b16 %v792, %v790
        %v1005 = vpack.c.b16 %v793, %v791
        %v1006 = vpack.c.b16 %v796, %v794
        %v1007 = vpack.c.b16 %v797, %v795
        %v1008 = vpack.c.b16 %v800, %v798
        %v1009 = vpack.c.b16 %v801, %v799
        %v1010 = vpack.c.b16 %v804, %v802
        %v1011 = vpack.c.b16 %v805, %v803
        %v1012 = vpack.c.b16 %v808, %v806
        %v1013 = vpack.c.b16 %v809, %v807
        %v1014 = vpack.c.b16 %v812, %v810
        %v1015 = vpack.c.b16 %v813, %v811
        %v1016 = vpack.c.b16 %v816, %v814
        %v1017 = vpack.c.b16 %v817, %v815
        %v1018 = vpack.c.b16 %v820, %v818
        %v1019 = vpack.c.b16 %v821, %v819
        %v1020 = vpack.c.b16 %v824, %v822
        %v1021 = vpack.c.b16 %v825, %v823
        %v1022 = vpack.c.b16 %v828, %v826
        %v1023 = vpack.c.b16 %v829, %v827
        %v1024 = vpack.c.b16 %v832, %v830
        %v1025 = vpack.c.b16 %v833, %v831
        %v1026 = vpack.c.b16 %v836, %v834
        %v1027 = vpack.c.b16 %v837, %v835
        %v1028 = vpack.c.b16 %v840, %v838
        %v1029 = vpack.c.b16 %v841, %v839
        %v1030 = vpack.c.b16 %v844, %v842
        %v1031 = vpack.c.b16 %v845, %v843
        %v1032 = vpack.c.b16 %v848, %v846
        %v1033 = vpack.c.b16 %v849, %v847
        %v1034 = vpack.c.b16 %v852, %v850
        %v1035 = vpack.c.b16 %v853, %v851
        %v1036 = vpack.c.b16 %v856, %v854
        %v1037 = vpack.c.b16 %v857, %v855
        %v1038 = vpack.c.b16 %v860, %v858
        %v1039 = vpack.c.b16 %v861, %v859
        %v1040 = vpack.c.b16 %v864, %v862
        %v1041 = vpack.c.b16 %v865, %v863
        %v1042 = vpack.c.b16 %v868, %v866
        %v1043 = vpack.c.b16 %v869, %v867
        %v1044 = vpack.c.b16 %v872, %v870
        %v1045 = vpack.c.b16 %v873, %v871
        %v1046 = vpack.c.b16 %v876, %v874
        %v1047 = vpack.c.b16 %v877, %v875
        %v1048 = vpack.c.b16 %v880, %v878
        %v1049 = vpack.c.b16 %v881, %v879
        %v1050 = vpack.c.b16 %v884, %v882
        %v1051 = vpack.c.b16 %v885, %v883
        %v1052 = vpack.c.b16 %v888, %v886
        %v1053 = vpack.c.b16 %v889, %v887
        %v1054 = vpack.c.b16 %v892, %v890
        %v1055 = vpack.c.b16 %v893, %v891
        %v1056 = vpack.c.b16 %v896, %v894
        %v1057 = vpack.c.b16 %v897, %v895
        %v1058 = vpack.c.b16 %v900, %v898
        %v1059 = vpack.c.b16 %v901, %v899
        %v1060 = vpack.c.b16 %v904, %v902
        %v1061 = vpack.c.b16 %v905, %v903
        %v1062 = vpack.c.b16 %v908, %v906
        %v1063 = vpack.c.b16 %v909, %v907
        %v1064 = vpack.c.b16 %v912, %v910
        %v1065 = vpack.c.b16 %v913, %v911
        %v1066 = vpack.c.b16 %v916, %v914
        %v1067 = vpack.c.b16 %v917, %v915
        %v1068 = vpack.c.b16 %v920, %v918
        %v1069 = vpack.c.b16 %v921, %v919
        %v1070 = vpack.c.b16 %v924, %v922
        %v1071 = vpack.c.b16 %v925, %v923
        %v1072 = vpack.c.b16 %v928, %v926
        %v1073 = vpack.c.b16 %v929, %v927
        %v1074 = vpack.c.b16 %v932, %v930
        %v1075 = vpack.c.b16 %v933, %v931
        %v1076 = vpack.c.b16 %v936, %v934
        %v1077 = vpack.c.b16 %v937, %v935
        %v1078 = vpack.c.b16 %v940, %v938
        %v1079 = vpack.c.b16 %v941, %v939
        %v1080 = vpack.c.b16 %v944, %v942
        %v1081 = vpack.c.b16 %v945, %v943
        %v1082 = vpack.c.b16 %v948, %v946
        %v1083 = vpack.c.b16 %v949, %v947
        %v1084 = vpack.c.b16 %v952, %v950
        %v1085 = vpack.c.b16 %v953, %v951
        %v1086 = vpack.c.b16 %v956, %v954
        %v1087 = vpack.c.b16 %v957, %v955
        %v1088 = vpack.c.b16 %v960, %v958
        %v1089 = vpack.c.b16 %v961, %v959
        %1218 = vmatprep.subr.bf16.mxu0 %v977
        %1219 = vmatpush1.bf16.msra.mxu0 %v976
        %1220 = vmatprep.subr.bf16.mxu0 %v975
        %1221 = vmatpush1.bf16.msra.mxu0 %v974
        %1222 = vmatprep.subr.bf16.mxu0 %v973
        %1223 = vmatpush1.bf16.msra.mxu0 %v972
        %1224 = vmatprep.subr.bf16.mxu0 %v971
        %1225 = vmatpush1.bf16.msra.mxu0 %v970
        %1226 = vmatprep.subr.bf16.mxu0 %v969
        %1227 = vmatpush1.bf16.msra.mxu0 %v968
        %1228 = vmatprep.subr.bf16.mxu0 %v967
        %1229 = vmatpush1.bf16.msra.mxu0 %v966
        %1230 = vmatprep.subr.bf16.mxu0 %v965
        %1231 = vmatpush1.bf16.msra.mxu0 %v964
        %1232 = vmatprep.subr.bf16.mxu0 %v963
        %1233 = vmatpush1.bf16.msra.mxu0 %v962
        %1234 = vmatprep.subr.bf16.mxu0 %v993
        %1235 = vmatpush2.bf16.msra.mxu0 %v992
        %1236 = vmatprep.subr.bf16.mxu0 %v991
        %1237 = vmatpush2.bf16.msra.mxu0 %v990
        %1238 = vmatprep.subr.bf16.mxu0 %v989
        %1239 = vmatpush2.bf16.msra.mxu0 %v988
        %1240 = vmatprep.subr.bf16.mxu0 %v987
        %1241 = vmatpush2.bf16.msra.mxu0 %v986
        %1242 = vmatprep.subr.bf16.mxu0 %v985
        %1243 = vmatpush2.bf16.msra.mxu0 %v984
        %1244 = vmatprep.subr.bf16.mxu0 %v983
        %1245 = vmatpush2.bf16.msra.mxu0 %v982
        %1246 = vmatprep.subr.bf16.mxu0 %v981
        %1247 = vmatpush2.bf16.msra.mxu0 %v980
        %1248 = vmatprep.subr.bf16.mxu0 %v979
        %1249 = vmatpush2.bf16.msra.mxu0 %v978
        %1250 = vmatprep.mubr.bf16.mxu0 %v383
        %1251 = vmatmul.mubr.bf16.gmra.mxu0 %v382
        %v1252 = vpop.f32.mrf.mxu0
        %v1253 = vadd.f32 %v571, %v1252
        %v1254 = vpop.f32.mrf.mxu0
        %v1255 = vadd.f32 %v575, %v1254
        %v1256 = vpop.f32.mrf.mxu0
        %v1257 = vadd.f32 %v571, %v1256
        %v1258 = vpop.f32.mrf.mxu0
        %v1259 = vadd.f32 %v575, %v1258
        %1260 = vmatprep.mubr.bf16.mxu0 %v391
        %1261 = vmatmul.mubr.bf16.gmra.mxu0 %v390
        %v1262 = vpop.f32.mrf.mxu0
        %v1263 = vadd.f32 %v571, %v1262
        %v1264 = vpop.f32.mrf.mxu0
        %v1265 = vadd.f32 %v575, %v1264
        %v1266 = vpop.f32.mrf.mxu0
        %v1267 = vadd.f32 %v571, %v1266
        %v1268 = vpop.f32.mrf.mxu0
        %v1269 = vadd.f32 %v575, %v1268
        %1270 = vmatprep.mubr.bf16.mxu0 %v399
        %1271 = vmatmul.mubr.bf16.gmra.mxu0 %v398
        %v1272 = vpop.f32.mrf.mxu0
        %v1273 = vadd.f32 %v571, %v1272
        %v1274 = vpop.f32.mrf.mxu0
        %v1275 = vadd.f32 %v575, %v1274
        %v1276 = vpop.f32.mrf.mxu0
        %v1277 = vadd.f32 %v571, %v1276
        %v1278 = vpop.f32.mrf.mxu0
        %v1279 = vadd.f32 %v575, %v1278
        %1280 = vmatprep.mubr.bf16.mxu0 %v407
        %1281 = vmatmul.mubr.bf16.gmra.mxu0 %v406
        %v1282 = vpop.f32.mrf.mxu0
        %v1283 = vadd.f32 %v571, %v1282
        %v1284 = vpop.f32.mrf.mxu0
        %v1285 = vadd.f32 %v575, %v1284
        %v1286 = vpop.f32.mrf.mxu0
        %v1287 = vadd.f32 %v571, %v1286
        %v1288 = vpop.f32.mrf.mxu0
        %v1289 = vadd.f32 %v575, %v1288
        %1290 = vmatprep.mubr.bf16.mxu0 %v415
        %1291 = vmatmul.mubr.bf16.gmra.mxu0 %v414
        %v1292 = vpop.f32.mrf.mxu0
        %v1293 = vadd.f32 %v571, %v1292
        %v1294 = vpop.f32.mrf.mxu0
        %v1295 = vadd.f32 %v575, %v1294
        %v1296 = vpop.f32.mrf.mxu0
        %v1297 = vadd.f32 %v571, %v1296
        %v1298 = vpop.f32.mrf.mxu0
        %v1299 = vadd.f32 %v575, %v1298
        %1300 = vmatprep.mubr.bf16.mxu0 %v423
        %1301 = vmatmul.mubr.bf16.gmra.mxu0 %v422
        %v1302 = vpop.f32.mrf.mxu0
        %v1303 = vadd.f32 %v571, %v1302
        %v1304 = vpop.f32.mrf.mxu0
        %v1305 = vadd.f32 %v575, %v1304
        %v1306 = vpop.f32.mrf.mxu0
        %v1307 = vadd.f32 %v571, %v1306
        %v1308 = vpop.f32.mrf.mxu0
        %v1309 = vadd.f32 %v575, %v1308
        %1310 = vmatprep.mubr.bf16.mxu0 %v431
        %1311 = vmatmul.mubr.bf16.gmra.mxu0 %v430
        %v1312 = vpop.f32.mrf.mxu0
        %v1313 = vadd.f32 %v571, %v1312
        %v1314 = vpop.f32.mrf.mxu0
        %v1315 = vadd.f32 %v575, %v1314
        %v1316 = vpop.f32.mrf.mxu0
        %v1317 = vpop.f32.mrf.mxu0
        %1318 = vdwg.mxu0
        %1319 = vmatprep.subr.bf16.mxu0 %v1009
        %1320 = vmatpush1.bf16.msra.mxu0 %v1008
        %1321 = vmatprep.subr.bf16.mxu0 %v1007
        %1322 = vmatpush1.bf16.msra.mxu0 %v1006
        %1323 = vmatprep.subr.bf16.mxu0 %v1005
        %1324 = vmatpush1.bf16.msra.mxu0 %v1004
        %1325 = vmatprep.subr.bf16.mxu0 %v1003
        %1326 = vmatpush1.bf16.msra.mxu0 %v1002
        %1327 = vmatprep.subr.bf16.mxu0 %v1001
        %1328 = vmatpush1.bf16.msra.mxu0 %v1000
        %1329 = vmatprep.subr.bf16.mxu0 %v999
        %1330 = vmatpush1.bf16.msra.mxu0 %v998
        %1331 = vmatprep.subr.bf16.mxu0 %v997
        %1332 = vmatpush1.bf16.msra.mxu0 %v996
        %1333 = vmatprep.subr.bf16.mxu0 %v995
        %1334 = vmatpush1.bf16.msra.mxu0 %v994
        %1335 = vmatprep.subr.bf16.mxu0 %v1025
        %1336 = vmatpush2.bf16.msra.mxu0 %v1024
        %1337 = vmatprep.subr.bf16.mxu0 %v1023
        %1338 = vmatpush2.bf16.msra.mxu0 %v1022
        %1339 = vmatprep.subr.bf16.mxu0 %v1021
        %1340 = vmatpush2.bf16.msra.mxu0 %v1020
        %1341 = vmatprep.subr.bf16.mxu0 %v1019
        %1342 = vmatpush2.bf16.msra.mxu0 %v1018
        %1343 = vmatprep.subr.bf16.mxu0 %v1017
        %1344 = vmatpush2.bf16.msra.mxu0 %v1016
        %1345 = vmatprep.subr.bf16.mxu0 %v1015
        %1346 = vmatpush2.bf16.msra.mxu0 %v1014
        %1347 = vmatprep.subr.bf16.mxu0 %v1013
        %1348 = vmatpush2.bf16.msra.mxu0 %v1012
        %1349 = vmatprep.subr.bf16.mxu0 %v1011
        %1350 = vmatpush2.bf16.msra.mxu0 %v1010
        %1351 = vmatprep.mubr.bf16.mxu0 %v385
        %1352 = vmatmul.mubr.bf16.gmra.mxu0 %v384
        %v1353 = vpop.f32.mrf.mxu0
        %v1354 = vadd.f32 %v1253, %v1353
        %v1355 = vpop.f32.mrf.mxu0
        %v1356 = vadd.f32 %v1255, %v1355
        %v1357 = vpop.f32.mrf.mxu0
        %v1358 = vadd.f32 %v1257, %v1357
        %v1359 = vpop.f32.mrf.mxu0
        %v1360 = vadd.f32 %v1259, %v1359
        %1361 = vmatprep.mubr.bf16.mxu0 %v393
        %1362 = vmatmul.mubr.bf16.gmra.mxu0 %v392
        %v1363 = vpop.f32.mrf.mxu0
        %v1364 = vadd.f32 %v1263, %v1363
        %v1365 = vpop.f32.mrf.mxu0
        %v1366 = vadd.f32 %v1265, %v1365
        %v1367 = vpop.f32.mrf.mxu0
        %v1368 = vadd.f32 %v1267, %v1367
        %v1369 = vpop.f32.mrf.mxu0
        %v1370 = vadd.f32 %v1269, %v1369
        %1371 = vmatprep.mubr.bf16.mxu0 %v401
        %1372 = vmatmul.mubr.bf16.gmra.mxu0 %v400
        %v1373 = vpop.f32.mrf.mxu0
        %v1374 = vadd.f32 %v1273, %v1373
        %v1375 = vpop.f32.mrf.mxu0
        %v1376 = vadd.f32 %v1275, %v1375
        %v1377 = vpop.f32.mrf.mxu0
        %v1378 = vadd.f32 %v1277, %v1377
        %v1379 = vpop.f32.mrf.mxu0
        %v1380 = vadd.f32 %v1279, %v1379
        %1381 = vmatprep.mubr.bf16.mxu0 %v409
        %1382 = vmatmul.mubr.bf16.gmra.mxu0 %v408
        %v1383 = vpop.f32.mrf.mxu0
        %v1384 = vadd.f32 %v1283, %v1383
        %v1385 = vpop.f32.mrf.mxu0
        %v1386 = vadd.f32 %v1285, %v1385
        %v1387 = vpop.f32.mrf.mxu0
        %v1388 = vadd.f32 %v1287, %v1387
        %v1389 = vpop.f32.mrf.mxu0
        %v1390 = vadd.f32 %v1289, %v1389
        %1391 = vmatprep.mubr.bf16.mxu0 %v417
        %1392 = vmatmul.mubr.bf16.gmra.mxu0 %v416
        %v1393 = vpop.f32.mrf.mxu0
        %v1394 = vadd.f32 %v1293, %v1393
        %v1395 = vpop.f32.mrf.mxu0
        %v1396 = vadd.f32 %v1295, %v1395
        %v1397 = vpop.f32.mrf.mxu0
        %v1398 = vadd.f32 %v1297, %v1397
        %v1399 = vpop.f32.mrf.mxu0
        %v1400 = vadd.f32 %v1299, %v1399
        %1401 = vmatprep.mubr.bf16.mxu0 %v425
        %1402 = vmatmul.mubr.bf16.gmra.mxu0 %v424
        %v1403 = vpop.f32.mrf.mxu0
        %v1404 = vadd.f32 %v1303, %v1403
        %v1405 = vpop.f32.mrf.mxu0
        %v1406 = vadd.f32 %v1305, %v1405
        %v1407 = vpop.f32.mrf.mxu0
        %v1408 = vadd.f32 %v1307, %v1407
        %v1409 = vpop.f32.mrf.mxu0
        %v1410 = vadd.f32 %v1309, %v1409
        %1411 = vmatprep.mubr.bf16.mxu0 %v433
        %1412 = vmatmul.mubr.bf16.gmra.mxu0 %v432
        %v1413 = vpop.f32.mrf.mxu0
        %v1414 = vadd.f32 %v1313, %v1413
        %v1415 = vpop.f32.mrf.mxu0
        %v1416 = vadd.f32 %v1315, %v1415
        %v1417 = vpop.f32.mrf.mxu0
        %v1418 = vpop.f32.mrf.mxu0
        %1419 = vdwg.mxu0
        %1420 = vmatprep.subr.bf16.mxu0 %v1041
        %1421 = vmatpush1.bf16.msra.mxu0 %v1040
        %1422 = vmatprep.subr.bf16.mxu0 %v1039
        %1423 = vmatpush1.bf16.msra.mxu0 %v1038
        %1424 = vmatprep.subr.bf16.mxu0 %v1037
        %1425 = vmatpush1.bf16.msra.mxu0 %v1036
        %1426 = vmatprep.subr.bf16.mxu0 %v1035
        %1427 = vmatpush1.bf16.msra.mxu0 %v1034
        %1428 = vmatprep.subr.bf16.mxu0 %v1033
        %1429 = vmatpush1.bf16.msra.mxu0 %v1032
        %1430 = vmatprep.subr.bf16.mxu0 %v1031
        %1431 = vmatpush1.bf16.msra.mxu0 %v1030
        %1432 = vmatprep.subr.bf16.mxu0 %v1029
        %1433 = vmatpush1.bf16.msra.mxu0 %v1028
        %1434 = vmatprep.subr.bf16.mxu0 %v1027
        %1435 = vmatpush1.bf16.msra.mxu0 %v1026
        %1436 = vmatprep.subr.bf16.mxu0 %v1057
        %1437 = vmatpush2.bf16.msra.mxu0 %v1056
        %1438 = vmatprep.subr.bf16.mxu0 %v1055
        %1439 = vmatpush2.bf16.msra.mxu0 %v1054
        %1440 = vmatprep.subr.bf16.mxu0 %v1053
        %1441 = vmatpush2.bf16.msra.mxu0 %v1052
        %1442 = vmatprep.subr.bf16.mxu0 %v1051
        %1443 = vmatpush2.bf16.msra.mxu0 %v1050
        %1444 = vmatprep.subr.bf16.mxu0 %v1049
        %1445 = vmatpush2.bf16.msra.mxu0 %v1048
        %1446 = vmatprep.subr.bf16.mxu0 %v1047
        %1447 = vmatpush2.bf16.msra.mxu0 %v1046
        %1448 = vmatprep.subr.bf16.mxu0 %v1045
        %1449 = vmatpush2.bf16.msra.mxu0 %v1044
        %1450 = vmatprep.subr.bf16.mxu0 %v1043
        %1451 = vmatpush2.bf16.msra.mxu0 %v1042
        %1452 = vmatprep.mubr.bf16.mxu0 %v387
        %1453 = vmatmul.mubr.bf16.gmra.mxu0 %v386
        %v1454 = vpop.f32.mrf.mxu0
        %v1455 = vadd.f32 %v1354, %v1454
        %v1456 = vpop.f32.mrf.mxu0
        %v1457 = vadd.f32 %v1356, %v1456
        %v1458 = vpop.f32.mrf.mxu0
        %v1459 = vadd.f32 %v1358, %v1458
        %v1460 = vpop.f32.mrf.mxu0
        %v1461 = vadd.f32 %v1360, %v1460
        %1462 = vmatprep.mubr.bf16.mxu0 %v395
        %1463 = vmatmul.mubr.bf16.gmra.mxu0 %v394
        %v1464 = vpop.f32.mrf.mxu0
        %v1465 = vadd.f32 %v1364, %v1464
        %v1466 = vpop.f32.mrf.mxu0
        %v1467 = vadd.f32 %v1366, %v1466
        %v1468 = vpop.f32.mrf.mxu0
        %v1469 = vadd.f32 %v1368, %v1468
        %v1470 = vpop.f32.mrf.mxu0
        %v1471 = vadd.f32 %v1370, %v1470
        %1472 = vmatprep.mubr.bf16.mxu0 %v403
        %1473 = vmatmul.mubr.bf16.gmra.mxu0 %v402
        %v1474 = vpop.f32.mrf.mxu0
        %v1475 = vadd.f32 %v1374, %v1474
        %v1476 = vpop.f32.mrf.mxu0
        %v1477 = vadd.f32 %v1376, %v1476
        %v1478 = vpop.f32.mrf.mxu0
        %v1479 = vadd.f32 %v1378, %v1478
        %v1480 = vpop.f32.mrf.mxu0
        %v1481 = vadd.f32 %v1380, %v1480
        %1482 = vmatprep.mubr.bf16.mxu0 %v411
        %1483 = vmatmul.mubr.bf16.gmra.mxu0 %v410
        %v1484 = vpop.f32.mrf.mxu0
        %v1485 = vadd.f32 %v1384, %v1484
        %v1486 = vpop.f32.mrf.mxu0
        %v1487 = vadd.f32 %v1386, %v1486
        %v1488 = vpop.f32.mrf.mxu0
        %v1489 = vadd.f32 %v1388, %v1488
        %v1490 = vpop.f32.mrf.mxu0
        %v1491 = vadd.f32 %v1390, %v1490
        %1492 = vmatprep.mubr.bf16.mxu0 %v419
        %1493 = vmatmul.mubr.bf16.gmra.mxu0 %v418
        %v1494 = vpop.f32.mrf.mxu0
        %v1495 = vadd.f32 %v1394, %v1494
        %v1496 = vpop.f32.mrf.mxu0
        %v1497 = vadd.f32 %v1396, %v1496
        %v1498 = vpop.f32.mrf.mxu0
        %v1499 = vadd.f32 %v1398, %v1498
        %v1500 = vpop.f32.mrf.mxu0
        %v1501 = vadd.f32 %v1400, %v1500
        %1502 = vmatprep.mubr.bf16.mxu0 %v427
        %1503 = vmatmul.mubr.bf16.gmra.mxu0 %v426
        %v1504 = vpop.f32.mrf.mxu0
        %v1505 = vadd.f32 %v1404, %v1504
        %v1506 = vpop.f32.mrf.mxu0
        %v1507 = vadd.f32 %v1406, %v1506
        %v1508 = vpop.f32.mrf.mxu0
        %v1509 = vadd.f32 %v1408, %v1508
        %v1510 = vpop.f32.mrf.mxu0
        %v1511 = vadd.f32 %v1410, %v1510
        %1512 = vmatprep.mubr.bf16.mxu0 %v435
        %1513 = vmatmul.mubr.bf16.gmra.mxu0 %v434
        %v1514 = vpop.f32.mrf.mxu0
        %v1515 = vadd.f32 %v1414, %v1514
        %v1516 = vpop.f32.mrf.mxu0
        %v1517 = vadd.f32 %v1416, %v1516
        %v1518 = vpop.f32.mrf.mxu0
        %v1519 = vpop.f32.mrf.mxu0
        %1520 = vdwg.mxu0
        %1521 = vmatprep.subr.bf16.mxu0 %v1073
        %1522 = vmatpush1.bf16.msra.mxu0 %v1072
        %1523 = vmatprep.subr.bf16.mxu0 %v1071
        %1524 = vmatpush1.bf16.msra.mxu0 %v1070
        %1525 = vmatprep.subr.bf16.mxu0 %v1069
        %1526 = vmatpush1.bf16.msra.mxu0 %v1068
        %1527 = vmatprep.subr.bf16.mxu0 %v1067
        %1528 = vmatpush1.bf16.msra.mxu0 %v1066
        %1529 = vmatprep.subr.bf16.mxu0 %v1065
        %1530 = vmatpush1.bf16.msra.mxu0 %v1064
        %1531 = vmatprep.subr.bf16.mxu0 %v1063
        %1532 = vmatpush1.bf16.msra.mxu0 %v1062
        %1533 = vmatprep.subr.bf16.mxu0 %v1061
        %1534 = vmatpush1.bf16.msra.mxu0 %v1060
        %1535 = vmatprep.subr.bf16.mxu0 %v1059
        %1536 = vmatpush1.bf16.msra.mxu0 %v1058
        %1537 = vmatprep.subr.bf16.mxu0 %v1089
        %1538 = vmatpush2.bf16.msra.mxu0 %v1088
        %1539 = vmatprep.subr.bf16.mxu0 %v1087
        %1540 = vmatpush2.bf16.msra.mxu0 %v1086
        %1541 = vmatprep.subr.bf16.mxu0 %v1085
        %1542 = vmatpush2.bf16.msra.mxu0 %v1084
        %1543 = vmatprep.subr.bf16.mxu0 %v1083
        %1544 = vmatpush2.bf16.msra.mxu0 %v1082
        %1545 = vmatprep.subr.bf16.mxu0 %v1081
        %1546 = vmatpush2.bf16.msra.mxu0 %v1080
        %1547 = vmatprep.subr.bf16.mxu0 %v1079
        %1548 = vmatpush2.bf16.msra.mxu0 %v1078
        %1549 = vmatprep.subr.bf16.mxu0 %v1077
        %1550 = vmatpush2.bf16.msra.mxu0 %v1076
        %1551 = vmatprep.subr.bf16.mxu0 %v1075
        %1552 = vmatpush2.bf16.msra.mxu0 %v1074
        %1553 = vmatprep.mubr.bf16.mxu0 %v389
        %1554 = vmatmul.mubr.bf16.gmra.mxu0 %v388
        %v1555 = vpop.f32.mrf.mxu0
        %v1556 = vadd.f32 %v1455, %v1555
        %v1557 = vpop.f32.mrf.mxu0
        %v1558 = vadd.f32 %v1457, %v1557
        %v1559 = vpop.f32.mrf.mxu0
        %v1560 = vadd.f32 %v1459, %v1559
        %v1561 = vpop.f32.mrf.mxu0
        %v1562 = vadd.f32 %v1461, %v1561
        %1563 = vmatprep.mubr.bf16.mxu0 %v397
        %1564 = vmatmul.mubr.bf16.gmra.mxu0 %v396
        %v1565 = vpop.f32.mrf.mxu0
        %v1566 = vadd.f32 %v1465, %v1565
        %v1567 = vpop.f32.mrf.mxu0
        %v1568 = vadd.f32 %v1467, %v1567
        %v1569 = vpop.f32.mrf.mxu0
        %v1570 = vadd.f32 %v1469, %v1569
        %v1571 = vpop.f32.mrf.mxu0
        %v1572 = vadd.f32 %v1471, %v1571
        %1573 = vmatprep.mubr.bf16.mxu0 %v405
        %1574 = vmatmul.mubr.bf16.gmra.mxu0 %v404
        %v1575 = vpop.f32.mrf.mxu0
        %v1576 = vadd.f32 %v1475, %v1575
        %v1577 = vpop.f32.mrf.mxu0
        %v1578 = vadd.f32 %v1477, %v1577
        %v1579 = vpop.f32.mrf.mxu0
        %v1580 = vadd.f32 %v1479, %v1579
        %v1581 = vpop.f32.mrf.mxu0
        %v1582 = vadd.f32 %v1481, %v1581
        %1583 = vmatprep.mubr.bf16.mxu0 %v413
        %1584 = vmatmul.mubr.bf16.gmra.mxu0 %v412
        %v1585 = vpop.f32.mrf.mxu0
        %v1586 = vadd.f32 %v1485, %v1585
        %v1587 = vpop.f32.mrf.mxu0
        %v1588 = vadd.f32 %v1487, %v1587
        %v1589 = vpop.f32.mrf.mxu0
        %v1590 = vadd.f32 %v1489, %v1589
        %v1591 = vpop.f32.mrf.mxu0
        %v1592 = vadd.f32 %v1491, %v1591
        %1593 = vmatprep.mubr.bf16.mxu0 %v421
        %1594 = vmatmul.mubr.bf16.gmra.mxu0 %v420
        %v1595 = vpop.f32.mrf.mxu0
        %v1596 = vadd.f32 %v1495, %v1595
        %v1597 = vpop.f32.mrf.mxu0
        %v1598 = vadd.f32 %v1497, %v1597
        %v1599 = vpop.f32.mrf.mxu0
        %v1600 = vadd.f32 %v1499, %v1599
        %v1601 = vpop.f32.mrf.mxu0
        %v1602 = vadd.f32 %v1501, %v1601
        %1603 = vmatprep.mubr.bf16.mxu0 %v429
        %1604 = vmatmul.mubr.bf16.gmra.mxu0 %v428
        %v1605 = vpop.f32.mrf.mxu0
        %v1606 = vadd.f32 %v1505, %v1605
        %v1607 = vpop.f32.mrf.mxu0
        %v1608 = vadd.f32 %v1507, %v1607
        %v1609 = vpop.f32.mrf.mxu0
        %v1610 = vadd.f32 %v1509, %v1609
        %v1611 = vpop.f32.mrf.mxu0
        %v1612 = vadd.f32 %v1511, %v1611
        %1613 = vmatprep.mubr.bf16.mxu0 %v437
        %1614 = vmatmul.mubr.bf16.gmra.mxu0 %v436
        %v1615 = vpop.f32.mrf.mxu0
        %v1616 = vadd.f32 %v1515, %v1615
        %v1617 = vpop.f32.mrf.mxu0
        %v1618 = vadd.f32 %v1517, %v1617
        %v1619 = vpop.f32.mrf.mxu0
        %v1620 = vpop.f32.mrf.mxu0
        %1621 = vdwg.mxu0
        %v1622 = vtanh.pop %v1556
        %v1623 = vtanh.pop %v1558
        %v1624 = vtanh.pop %v1560
        %v1625 = vtanh.pop %v1562
        %v1626 = vtanh.pop %v1566
        %v1627 = vtanh.pop %v1568
        %v1628 = vtanh.pop %v1570
        %v1629 = vtanh.pop %v1572
        %v1630 = vtanh.pop %v1576
        %v1631 = vtanh.pop %v1578
        %v1632 = vtanh.pop %v1580
        %v1633 = vtanh.pop %v1582
        %v1634 = vtanh.pop %v1586
        %v1635 = vtanh.pop %v1588
        %v1636 = vtanh.pop %v1590
        %v1637 = vtanh.pop %v1592
        %v1638 = vtanh.pop %v1596
        %v1639 = vtanh.pop %v1598
        %v1640 = vtanh.pop %v1600
        %v1641 = vtanh.pop %v1602
        %v1642 = vtanh.pop %v1606
        %v1643 = vtanh.pop %v1608
        %v1644 = vtanh.pop %v1610
        %v1645 = vtanh.pop %v1612
        %v1646 = vtanh.pop %v1616
        %v1647 = vtanh.pop %v1618
        %v1648 = vpack.c.bf16 %v1624, %v1622
        %v1649 = vpack.c.bf16 %v1625, %v1623
        %v1650 = vpack.c.bf16 %v1628, %v1626
        %v1651 = vpack.c.bf16 %v1629, %v1627
        %v1652 = vpack.c.bf16 %v1632, %v1630
        %v1653 = vpack.c.bf16 %v1633, %v1631
        %v1654 = vpack.c.bf16 %v1636, %v1634
        %v1655 = vpack.c.bf16 %v1637, %v1635
        %v1656 = vpack.c.bf16 %v1640, %v1638
        %v1657 = vpack.c.bf16 %v1641, %v1639
        %v1658 = vpack.c.bf16 %v1644, %v1642
        %v1659 = vpack.c.bf16 %v1645, %v1643
        %v1660 = vpack.c.bf16 %v1646, %v1646
        %v1661 = vpack.c.bf16 %v1647, %v1647
        %v1662 = vld [vmem:[#allocation6] sm:$0xf]
        %v1663 = vld [vmem:[#allocation6 + $0x4] sm:$0xf]
        %v1664 = vld [vmem:[#allocation6 + $0x8] sm:$0xf]
        %v1665 = vld [vmem:[#allocation6 + $0xc] sm:$0xf]
        %v1666 = vld [vmem:[#allocation6 + $0x10] sm:$0xf]
        %v1667 = vld [vmem:[#allocation6 + $0x14] sm:$0xf]
        %v1668 = vld [vmem:[#allocation6 + $0x18] sm:$0xf]
        %v1669 = vld [vmem:[#allocation6 + $0x1c] sm:$0xf]
        %v1670 = vld [vmem:[#allocation6 + $0x20] sm:$0xf]
        %v1671 = vld [vmem:[#allocation6 + $0x24] sm:$0xf]
        %v1672 = vld [vmem:[#allocation6 + $0x28] sm:$0xf]
        %v1673 = vld [vmem:[#allocation6 + $0x2c] sm:$0xf]
        %v1674 = vld [vmem:[#allocation6 + $0x30] sm:$0xf]
        %v1675 = vld [vmem:[#allocation6 + $0x34] sm:$0xf]
        %v1676 = vld [vmem:[#allocation6 + $0x38] sm:$0xf]
        %v1677 = vld [vmem:[#allocation6 + $0x3c] sm:$0xf]
        %v1678 = vld [vmem:[#allocation6 + $0x40] sm:$0xf]
        %v1679 = vld [vmem:[#allocation6 + $0x44] sm:$0xf]
        %v1680 = vld [vmem:[#allocation6 + $0x48] sm:$0xf]
        %v1681 = vld [vmem:[#allocation6 + $0x4c] sm:$0xf]
        %v1682 = vld [vmem:[#allocation6 + $0x50] sm:$0xf]
        %v1683 = vld [vmem:[#allocation6 + $0x54] sm:$0xf]
        %v1684 = vld [vmem:[#allocation6 + $0x58] sm:$0xf]
        %v1685 = vld [vmem:[#allocation6 + $0x5c] sm:$0xf]
        %v1686 = vld [vmem:[#allocation6 + $0x60] sm:$0xf]
        %v1687 = vld [vmem:[#allocation6 + $0x64] sm:$0xf]
        %v1688 = vld [vmem:[#allocation6 + $0x68] sm:$0xf]
        %v1689 = vld [vmem:[#allocation6 + $0x6c] sm:$0xf]
        %v1690 = vld [vmem:[#allocation6 + $0x70] sm:$0xf]
        %v1691 = vld [vmem:[#allocation6 + $0x74] sm:$0xf]
        %v1692 = vld [vmem:[#allocation6 + $0x78] sm:$0xf]
        %v1693 = vld [vmem:[#allocation6 + $0x7c] sm:$0xf]
        %v1694 = vld [vmem:[%s4] sm:$0x1]
        %v1696 = vlaneseq
        %v1697 = vshrl.u32 %v1696, 7
        %v1698 = vsub.s32 0, %v1697
        %v1699 = vrot.slane %v1694, %v1698
        %v1733 = vunpack.c.l.b16 %v1662
        %v1734 = vunpack.c.l.b16 %v1663
        %v1735 = vunpack.c.l.b16 %v1664
        %v1736 = vunpack.c.l.b16 %v1665
        %v1737 = vunpack.c.l.b16 %v1666
        %v1738 = vunpack.c.l.b16 %v1667
        %v1739 = vunpack.c.l.b16 %v1668
        %v1740 = vunpack.c.l.b16 %v1669
        %v1741 = vunpack.c.l.b16 %v1670
        %v1742 = vunpack.c.l.b16 %v1671
        %v1743 = vunpack.c.l.b16 %v1672
        %v1744 = vunpack.c.l.b16 %v1673
        %v1745 = vunpack.c.l.b16 %v1674
        %v1746 = vunpack.c.l.b16 %v1675
        %v1747 = vunpack.c.l.b16 %v1676
        %v1748 = vunpack.c.l.b16 %v1677
        %v1749 = vunpack.c.l.b16 %v1678
        %v1750 = vunpack.c.l.b16 %v1679
        %v1751 = vunpack.c.l.b16 %v1680
        %v1752 = vunpack.c.l.b16 %v1681
        %v1753 = vunpack.c.l.b16 %v1682
        %v1754 = vunpack.c.l.b16 %v1683
        %v1755 = vunpack.c.l.b16 %v1684
        %v1756 = vunpack.c.l.b16 %v1685
        %v1757 = vunpack.c.l.b16 %v1686
        %v1758 = vunpack.c.l.b16 %v1687
        %v1759 = vunpack.c.l.b16 %v1688
        %v1760 = vunpack.c.l.b16 %v1689
        %v1761 = vunpack.c.l.b16 %v1690
        %v1762 = vunpack.c.l.b16 %v1691
        %v1763 = vunpack.c.l.b16 %v1692
        %v1764 = vunpack.c.l.b16 %v1693
        %v1765 = vpack.c.b16 %v1734, %v1733
        %v1766 = vpack.c.b16 %v1736, %v1735
        %v1767 = vpack.c.b16 %v1738, %v1737
        %v1768 = vpack.c.b16 %v1740, %v1739
        %v1769 = vpack.c.b16 %v1742, %v1741
        %v1770 = vpack.c.b16 %v1744, %v1743
        %v1771 = vpack.c.b16 %v1746, %v1745
        %v1772 = vpack.c.b16 %v1748, %v1747
        %v1773 = vpack.c.b16 %v1750, %v1749
        %v1774 = vpack.c.b16 %v1752, %v1751
        %v1775 = vpack.c.b16 %v1754, %v1753
        %v1776 = vpack.c.b16 %v1756, %v1755
        %v1777 = vpack.c.b16 %v1758, %v1757
        %v1778 = vpack.c.b16 %v1760, %v1759
        %v1779 = vpack.c.b16 %v1762, %v1761
        %v1780 = vpack.c.b16 %v1764, %v1763
        %1797 = vmatprep.subr.bf16.mxu0 0
        %1798 = vmatpush1.bf16.msra.mxu0 %v1772
        %1799 = vmatprep.subr.bf16.mxu0 0
        %1800 = vmatpush1.bf16.msra.mxu0 %v1771
        %1801 = vmatprep.subr.bf16.mxu0 0
        %1802 = vmatpush1.bf16.msra.mxu0 %v1770
        %1803 = vmatprep.subr.bf16.mxu0 0
        %1804 = vmatpush1.bf16.msra.mxu0 %v1769
        %1805 = vmatprep.subr.bf16.mxu0 0
        %1806 = vmatpush1.bf16.msra.mxu0 %v1768
        %1807 = vmatprep.subr.bf16.mxu0 0
        %1808 = vmatpush1.bf16.msra.mxu0 %v1767
        %1809 = vmatprep.subr.bf16.mxu0 0
        %1810 = vmatpush1.bf16.msra.mxu0 %v1766
        %1811 = vmatprep.subr.bf16.mxu0 0
        %1812 = vmatpush1.bf16.msra.mxu0 %v1765
        %1813 = vmatprep.subr.bf16.mxu0 0
        %1814 = vmatpush2.bf16.msra.mxu0 %v1780
        %1815 = vmatprep.subr.bf16.mxu0 0
        %1816 = vmatpush2.bf16.msra.mxu0 %v1779
        %1817 = vmatprep.subr.bf16.mxu0 0
        %1818 = vmatpush2.bf16.msra.mxu0 %v1778
        %1819 = vmatprep.subr.bf16.mxu0 0
        %1820 = vmatpush2.bf16.msra.mxu0 %v1777
        %1821 = vmatprep.subr.bf16.mxu0 0
        %1822 = vmatpush2.bf16.msra.mxu0 %v1776
        %1823 = vmatprep.subr.bf16.mxu0 0
        %1824 = vmatpush2.bf16.msra.mxu0 %v1775
        %1825 = vmatprep.subr.bf16.mxu0 0
        %1826 = vmatpush2.bf16.msra.mxu0 %v1774
        %1827 = vmatprep.subr.bf16.mxu0 0
        %1828 = vmatpush2.bf16.msra.mxu0 %v1773
        %1829 = vmatprep.mubr.bf16.mxu0 %v1649
        %1830 = vmatmul.mubr.bf16.gmra.mxu0 %v1648
        %v1831 = vpop.f32.mrf.mxu0
        %v1832 = vadd.f32 %v1699, %v1831
        %v1833 = vpop.f32.mrf.mxu0
        %v1834 = vpop.f32.mrf.mxu0
        %v1835 = vadd.f32 %v1699, %v1834
        %v1836 = vpop.f32.mrf.mxu0
        %1837 = vmatprep.mubr.bf16.mxu0 %v1651
        %1838 = vmatmul.mubr.bf16.gmra.mxu0 %v1650
        %v1839 = vpop.f32.mrf.mxu0
        %v1840 = vadd.f32 %v1699, %v1839
        %v1841 = vpop.f32.mrf.mxu0
        %v1842 = vpop.f32.mrf.mxu0
        %v1843 = vadd.f32 %v1699, %v1842
        %v1844 = vpop.f32.mrf.mxu0
        %1845 = vmatprep.mubr.bf16.mxu0 %v1653
        %1846 = vmatmul.mubr.bf16.gmra.mxu0 %v1652
        %v1847 = vpop.f32.mrf.mxu0
        %v1848 = vadd.f32 %v1699, %v1847
        %v1849 = vpop.f32.mrf.mxu0
        %v1850 = vpop.f32.mrf.mxu0
        %v1851 = vadd.f32 %v1699, %v1850
        %v1852 = vpop.f32.mrf.mxu0
        %1853 = vmatprep.mubr.bf16.mxu0 %v1655
        %1854 = vmatmul.mubr.bf16.gmra.mxu0 %v1654
        %v1855 = vpop.f32.mrf.mxu0
        %v1856 = vadd.f32 %v1699, %v1855
        %v1857 = vpop.f32.mrf.mxu0
        %v1858 = vpop.f32.mrf.mxu0
        %v1859 = vadd.f32 %v1699, %v1858
        %v1860 = vpop.f32.mrf.mxu0
        %1861 = vmatprep.mubr.bf16.mxu0 %v1657
        %1862 = vmatmul.mubr.bf16.gmra.mxu0 %v1656
        %v1863 = vpop.f32.mrf.mxu0
        %v1864 = vadd.f32 %v1699, %v1863
        %v1865 = vpop.f32.mrf.mxu0
        %v1866 = vpop.f32.mrf.mxu0
        %v1867 = vadd.f32 %v1699, %v1866
        %v1868 = vpop.f32.mrf.mxu0
        %1869 = vmatprep.mubr.bf16.mxu0 %v1659
        %1870 = vmatmul.mubr.bf16.gmra.mxu0 %v1658
        %v1871 = vpop.f32.mrf.mxu0
        %v1872 = vadd.f32 %v1699, %v1871
        %v1873 = vpop.f32.mrf.mxu0
        %v1874 = vpop.f32.mrf.mxu0
        %v1875 = vadd.f32 %v1699, %v1874
        %v1876 = vpop.f32.mrf.mxu0
        %1877 = vmatprep.mubr.bf16.mxu0 %v1661
        %1878 = vmatmul.mubr.bf16.gmra.mxu0 %v1660
        %v1879 = vpop.f32.mrf.mxu0
        %v1880 = vadd.f32 %v1699, %v1879
        %v1881 = vpop.f32.mrf.mxu0
        %v1882 = vpop.f32.mrf.mxu0
        %v1883 = vpop.f32.mrf.mxu0
        %1884 = vdwg.mxu0
        %vm1885 = vcmask 7168
        %1886 = vst.msk [vmem:[%s275] sm:$0xff] %vm1885, %v1832
        %1887 = vst.msk [vmem:[%s275 + $0x8] sm:$0xff] %vm1885, %v1835
        %1888 = vst.msk [vmem:[%s275 + $0x10] sm:$0xff] %vm1885, %v1840
        %1889 = vst.msk [vmem:[%s275 + $0x18] sm:$0xff] %vm1885, %v1843
        %1890 = vst.msk [vmem:[%s275 + $0x20] sm:$0xff] %vm1885, %v1848
        %1891 = vst.msk [vmem:[%s275 + $0x28] sm:$0xff] %vm1885, %v1851
        %1892 = vst.msk [vmem:[%s275 + $0x30] sm:$0xff] %vm1885, %v1856
        %1893 = vst.msk [vmem:[%s275 + $0x38] sm:$0xff] %vm1885, %v1859
        %1894 = vst.msk [vmem:[%s275 + $0x40] sm:$0xff] %vm1885, %v1864
        %1895 = vst.msk [vmem:[%s275 + $0x48] sm:$0xff] %vm1885, %v1867
        %1896 = vst.msk [vmem:[%s275 + $0x50] sm:$0xff] %vm1885, %v1872
        %1897 = vst.msk [vmem:[%s275 + $0x58] sm:$0xff] %vm1885, %v1875
        %1898 = vst.msk [vmem:[%s275 + $0x60] sm:$0xff] %vm1885, %v1880
        %s1899 = smul.u32 13, %s20
        %p1900 = scmp.lt.s32.totalorder %s1899, 25
        %s1901 = scalar_select %p1900, %s1899, 25
        %s1902 = smul.addr %s1901, 8
        %s1903 = scalar_lea.vmem %s5, %s1902
        // Predicated region
        $region53: #{tpu_custom_call.1} parent=39 // pred_check
          %p1904 = pneg %p148
        $region54: #{tpu_custom_call.1} parent=39 // pred_check_branch
          %1906 = sbr.rel (%p1904) target = $region56
        $region55: #{tpu_custom_call.1} parent=39 // pred_region
          %s1907 = smul.u32 13, %s20
        $region56: #{tpu_custom_call.1} parent=39 // pred_fallthru
          _
      $region40: #{tpu_custom_call.1} parent=5 // pred_fallthru
        _
      %p1908 = scmp.le.s32.totalorder 2, %s15
      // Predicated region
      $region57: #{tpu_custom_call.1} parent=5 // pred_check
        %p1909 = pneg %p1908
      $region58: #{tpu_custom_call.1} parent=5 // pred_check_branch
        %1911 = sbr.rel (%p1909) target = $region60
      $region59: #{tpu_custom_call.1} parent=5 // pred_region
        %s1912 = ssub.s32 %s15, 2
        // Predicated region
        $region61: #{tpu_custom_call.1} parent=59 // pred_check
          %p1913 = pneg %p154
        $region62: #{tpu_custom_call.1} parent=59 // pred_check_branch
          %1915 = sbr.rel (%p1913) target = $region64
        $region63: #{tpu_custom_call.1} parent=59 // pred_region
          %s1916 = smul.u32 13, %s21
          %p1917 = scmp.lt.s32.totalorder %s1916, 25
          %s1918 = scalar_select %p1917, %s1916, 25
          %s1919 = smul.addr %s1918, 8
          %s1920 = scalar_lea.vmem %s5, %s1919
        $region64: #{tpu_custom_call.1} parent=59 // pred_fallthru
          _
      $region60: #{tpu_custom_call.1} parent=5 // pred_fallthru
        _
    $region6: #{tpu_custom_call.1} parent=1 // loop_footer
      %s19 = sadd.s32 1, %s15
    $region7: #{tpu_custom_call.1} parent=1 // loop_footer_branch
      %14 = sbr.rel target = $region3
    $region8: #{tpu_custom_call.1} parent=1 // loop_exit
      _
    %1921 = vsyncpa [#allocation3], 1
    %s1922 = scalar_lea.sflag [#allocation3], 1
    %1923 = vsyncpa %s1922, 1
    %1924 = vsyncpa [#allocation5], 1

</llo_original>
